<compile_context>
chip_gen: v6e
topology: v6e:2x2x1
jax: 0.10.0
libtpu: 0.0.40
codegen_flags: <defaults>
</compile_context>

<pallas_src>
import functools

import jax
import jax.numpy as jnp
from jax.experimental import pallas as pl
from jax.experimental.pallas import tpu as pltpu

# Finite "-inf": exp(-1e30 - finite_max) underflows to exactly 0.0 in f32, so
# masked_fill_(-inf) semantics are preserved while staying flash/bf16 safe.
_MASK_VAL = -1e30


def gat_project_kernel(h_ref, w_ref, asrc_ref, adst_ref,
                       hp_ref, src_ref, dstT_ref, *, n_head, f_out):
    """One-shot, query-independent work (was recomputed per grid step before).

    h_ref    : (TN, F_IN)   f32 node-feature rows
    w_ref    : (F_IN, H*F_OUT) all heads' projections, lane-concatenated
    asrc_ref : (H*F_OUT, H) block-diagonal a_src
    adst_ref : (H*F_OUT, H) block-diagonal a_dst
    hp_ref   : (H, TN, F_OUT) bf16 projected features, head-major
    src_ref  : (TN, H) f32 source attention logits
    dstT_ref : (H, TN) f32 destination attention logits (transposed ONCE here)
    """
    hp = jnp.dot(h_ref[...].astype(jnp.bfloat16),
                 w_ref[...].astype(jnp.bfloat16),
                 preferred_element_type=jnp.float32)              # (TN, H*F_OUT)
    src_ref[...] = jnp.dot(hp, asrc_ref[...],
                           preferred_element_type=jnp.float32)    # (TN, H)
    dst = jnp.dot(hp, adst_ref[...],
                  preferred_element_type=jnp.float32)             # (TN, H)
    dstT_ref[...] = jnp.transpose(dst)                            # (H, TN)
    # Head-major bf16 copy for the attention kernel's value side: per-head
    # slices there become leading-index views (no 64-lane relayouts in the
    # hot loop).  This slicing happens only once per node row.
    for hd in range(n_head):
        hp_ref[hd] = hp[:, hd * f_out:(hd + 1) * f_out].astype(jnp.bfloat16)


def gat_attn_kernel(src_ref, dstT_ref, adj_ref, hp_ref, bias_ref,
                    out_ref, m_sc, l_sc, *, n_head):
    """Flash-style masked softmax + attn @ V for one (query-tile, kv-tile).

    src_ref  : (TQ, H)          precomputed source logits (query rows)
    dstT_ref : (H, TJ)          precomputed destination logits (kv rows)
    adj_ref  : (TQ, TJ) int32   adjacency tile (nonzero = edge)
    hp_ref   : (H, TJ, F_OUT)   bf16 projected features (value side)
    bias_ref : (1, F_OUT)       f32 bias
    out_ref  : (H, TQ, F_OUT)   f32 output block (resident accumulator over j)
    m_sc/l_sc: (H, TQ, 1)       f32 online-softmax running max / denominator
    """
    j = pl.program_id(1)

    @pl.when(j == 0)
    def _():
        m_sc[...] = jnp.full_like(m_sc, -jnp.inf)
        l_sc[...] = jnp.zeros_like(l_sc)
        out_ref[...] = jnp.zeros_like(out_ref)

    edge = adj_ref[...] != 0                                       # (TQ, TJ)

    for hd in range(n_head):
        e = src_ref[:, hd:hd + 1] + dstT_ref[hd:hd + 1, :]         # (TQ, TJ)
        e = jnp.maximum(e, 0.2 * e)                                # LeakyReLU(0.2)
        e = jnp.where(edge, e, _MASK_VAL)                          # masked_fill_
        m_prev = m_sc[hd]                                          # (TQ, 1)
        m_new = jnp.maximum(m_prev, jnp.max(e, axis=-1, keepdims=True))
        alpha = jnp.exp(m_prev - m_new)
        p = jnp.exp(e - m_new)                                     # (TQ, TJ) f32
        l_sc[hd] = alpha * l_sc[hd] + jnp.sum(p, axis=-1, keepdims=True)
        m_sc[hd] = m_new
        # TODO(synk): attention dropout omitted (eval-mode identity); training
        # would use pltpu.prng_seed + pltpu.prng_random_bits on p here.
        out_ref[hd] = alpha * out_ref[hd] + jnp.dot(
            p.astype(jnp.bfloat16), hp_ref[hd],
            preferred_element_type=jnp.float32)                    # (TQ, F_OUT)

    @pl.when(j == pl.num_programs(1) - 1)
    def _():
        for hd in range(n_head):
            inv_l = pl.reciprocal(l_sc[hd], approx=True)           # (TQ, 1)
            out_ref[hd] = out_ref[hd] * inv_l + bias_ref[...]


def _pick_block(n, preferred):
    for b in preferred:
        if b <= n and n % b == 0:
            return b
    return n


def _vmem_limit(per_step_bytes):
    # Double-buffered inputs + headroom; clamp to [32 MiB, 48 MiB] so v5e's
    # 16 MiB default scoped VMEM is lifted while staying under v7x's 64 MiB.
    return int(min(max(4 * per_step_bytes, 32 << 20), 48 << 20))


def multi_head_graph_attention(h, adj, w, a_src, a_dst, bias,
                               *, block_q=None, block_j=None, block_n=None):
    """h: (N, F_IN) f32; adj: (N, N) nonzero = edge; w: (H, F_IN, F_OUT);
    a_src/a_dst: (H, F_OUT); bias: (F_OUT,) or (1, F_OUT).
    Returns (H, N, F_OUT) f32 — same as the PyTorch module."""
    n, f_in = h.shape
    n_head, _, f_out = w.shape
    hf = n_head * f_out

    if block_n is None:
        block_n = _pick_block(n, (256, 128))
    if block_q is None:
        block_q = _pick_block(n, (256, 128))
    if block_j is None:
        block_j = _pick_block(n, (512, 256, 128))
    assert n % block_n == 0 and n % block_q == 0 and n % block_j == 0
    assert block_q == n or block_q % 8 == 0
    assert block_n == n or block_n % 128 == 0     # dstT output lane dim
    assert block_j == n or block_j % 128 == 0     # dstT / adj lane dim

    # ---- wrapper-side parameter packing (tiny, one-off layout plumbing) ----
    w_all = jnp.transpose(w, (1, 0, 2)).reshape(f_in, hf)              # (F_IN, HF)
    eye = jnp.eye(n_head, dtype=w.dtype)
    a_src_blk = (a_src[:, :, None] * eye[:, None, :]).reshape(hf, n_head)
    a_dst_blk = (a_dst[:, :, None] * eye[:, None, :]).reshape(hf, n_head)
    bias_2d = jnp.reshape(bias, (1, f_out)).astype(jnp.float32)
    adj_i32 = adj.astype(jnp.int32)

    # ---------------- kernel A: one-shot projection + logits ----------------
    proj_est = (block_n * f_in * 4 + f_in * hf * 4 + 2 * hf * n_head * 4
                + n_head * block_n * f_out * 2 + 2 * block_n * n_head * 4)
    hp, src, dst_t = pl.pallas_call(
        functools.partial(gat_project_kernel, n_head=n_head, f_out=f_out),
        out_shape=(
            jax.ShapeDtypeStruct((n_head, n, f_out), jnp.bfloat16),    # hp
            jax.ShapeDtypeStruct((n, n_head), jnp.float32),            # src logits
            jax.ShapeDtypeStruct((n_head, n), jnp.float32),            # dst logits^T
        ),
        grid_spec=pltpu.PrefetchScalarGridSpec(
            num_scalar_prefetch=0,
            grid=(n // block_n,),
            in_specs=[
                pl.BlockSpec((block_n, f_in), lambda i: (i, 0)),       # h rows
                pl.BlockSpec((f_in, hf), lambda i: (0, 0)),            # W_all
                pl.BlockSpec((hf, n_head), lambda i: (0, 0)),          # a_src blkdiag
                pl.BlockSpec((hf, n_head), lambda i: (0, 0)),          # a_dst blkdiag
            ],
            out_specs=(
                pl.BlockSpec((n_head, block_n, f_out), lambda i: (0, i, 0)),
                pl.BlockSpec((block_n, n_head), lambda i: (i, 0)),
                pl.BlockSpec((n_head, block_n), lambda i: (0, i)),
            ),
        ),
        compiler_params=pltpu.CompilerParams(
            dimension_semantics=("parallel",),
            vmem_limit_bytes=_vmem_limit(proj_est)),
    )(h, w_all, a_src_blk, a_dst_blk)

    # --------- kernel B: flash-style masked softmax + attn @ V --------------
    attn_est = (2 * (block_q * n_head * 4 + n_head * block_j * 4
                     + block_q * block_j * 4 + n_head * block_j * f_out * 2
                     + f_out * 4)
                + n_head * block_q * f_out * 4
                + 2 * n_head * block_q * 128 * 4)
    out = pl.pallas_call(
        functools.partial(gat_attn_kernel, n_head=n_head),
        out_shape=jax.ShapeDtypeStruct((n_head, n, f_out), jnp.float32),
        grid_spec=pltpu.PrefetchScalarGridSpec(
            num_scalar_prefetch=0,
            grid=(n // block_q, n // block_j),
            in_specs=[
                pl.BlockSpec((block_q, n_head), lambda i, j: (i, 0)),          # src
                pl.BlockSpec((n_head, block_j), lambda i, j: (0, j)),          # dstT
                pl.BlockSpec((block_q, block_j), lambda i, j: (i, j)),         # adj
                pl.BlockSpec((n_head, block_j, f_out), lambda i, j: (0, j, 0)),# hp
                pl.BlockSpec((1, f_out), lambda i, j: (0, 0)),                 # bias
            ],
            out_specs=pl.BlockSpec((n_head, block_q, f_out),
                                   lambda i, j: (0, i, 0)),
            scratch_shapes=[
                pltpu.VMEM((n_head, block_q, 1), jnp.float32),   # running max m
                pltpu.VMEM((n_head, block_q, 1), jnp.float32),   # running denom l
            ],
        ),
        compiler_params=pltpu.CompilerParams(
            dimension_semantics=("parallel", "arbitrary"),
            vmem_limit_bytes=_vmem_limit(attn_est)),
    )(src, dst_t, adj_i32, hp, bias_2d)
    return out


def reference(h, adj, w, a_src, a_dst, bias):
    """Pure-JAX f32 mirror of the PyTorch forward (dropout = identity)."""
    h_prime = jnp.einsum("ni,hio->hno", h, w)                         # (H, N, F_OUT)
    attn_src = jnp.einsum("hno,ho->hn", h_prime, a_src)[:, :, None]    # (H, N, 1)
    attn_dst = jnp.einsum("hno,ho->hn", h_prime, a_dst)[:, None, :]    # (H, 1, N)
    e = attn_src + attn_dst
    e = jnp.where(e >= 0, e, 0.2 * e)
    e = jnp.where(adj[None, :, :] != 0, e, -jnp.inf)
    attn = jax.nn.softmax(e, axis=-1)
    out = jnp.einsum("hnm,hmo->hno", attn, h_prime)
    return out + bias[None, :, :]


if __name__ == "__main__":
    # N nodes, F_IN -> F_OUT per head, N_HEAD heads.  N=256 with 128-tiles
    # exercises both the "parallel" query axis and the multi-step online
    # softmax over the kv axis.
    N, F_IN, F_OUT, N_HEAD = 256, 32, 64, 4

    key = jax.random.PRNGKey(0)
    k_h, k_adj, k_w, k_src, k_dst = jax.random.split(key, 5)

    h = jax.random.normal(k_h, (N, F_IN), dtype=jnp.float32)

    # Random adjacency with self loops (avoids all-masked rows -> NaN, as in PyTorch).
    adj = (jax.random.uniform(k_adj, (N, N)) > 0.5).astype(jnp.int32)
    adj = adj | jnp.eye(N, dtype=jnp.int32)

    # Xavier-uniform-style init, matching nn.init.xavier_uniform_.
    bw = (6.0 / (F_IN + F_OUT)) ** 0.5
    w = jax.random.uniform(k_w, (N_HEAD, F_IN, F_OUT), minval=-bw, maxval=bw,
                           dtype=jnp.float32)
    ba = (6.0 / (F_OUT + 1)) ** 0.5
    a_src = jax.random.uniform(k_src, (N_HEAD, F_OUT), minval=-ba, maxval=ba,
                               dtype=jnp.float32)
    a_dst = jax.random.uniform(k_dst, (N_HEAD, F_OUT), minval=-ba, maxval=ba,
                               dtype=jnp.float32)
    bias = jnp.zeros((1, F_OUT), dtype=jnp.float32)   # nn.init.constant_(bias, 0)

    out = multi_head_graph_attention(h, adj, w, a_src, a_dst, bias,
                                     block_q=128, block_j=128)
    out = jax.block_until_ready(out)

    ref = reference(h, adj, w, a_src, a_dst, bias)
    assert out.shape == (N_HEAD, N, F_OUT)
    # Tolerance accounts for bf16 MXU operands (f32 accumulation) and the
    # approximate EUP reciprocal; measured error is ~1e-3 absolute here.
    assert jnp.allclose(out, ref, atol=2e-2, rtol=2e-2), "mismatch vs JAX reference"

    print("KERNEL_OK")
</pallas_src>

<mosaic_0001>
module attributes {stable_mosaic.version = 11 : i64} {
  func.func @gat_project_kernel(%arg0: i32, %arg1: memref<256x32xf32, #tpu.memory_space<vmem>>, %arg2: memref<32x256xf32, #tpu.memory_space<vmem>>, %arg3: memref<256x4xf32, #tpu.memory_space<vmem>>, %arg4: memref<256x4xf32, #tpu.memory_space<vmem>>, %arg5: memref<4x256x64xbf16, #tpu.memory_space<vmem>>, %arg6: memref<256x4xf32, #tpu.memory_space<vmem>>, %arg7: memref<4x256xf32, #tpu.memory_space<vmem>>) attributes {dimension_semantics = [#tpu.dimension_semantics<parallel>], iteration_bounds = array<i64: 1>, scalar_prefetch = 0 : i64, scratch_operands = 0 : i64, tpu.core_type = #tpu.core_type<tc>, window_params = [{transform_indices = @transform_0, window_bounds = array<i64: 256, 32>}, {pipeline_mode = #tpu.pipeline_mode<synchronous>, transform_indices = @transform_1, window_bounds = array<i64: 32, 256>}, {pipeline_mode = #tpu.pipeline_mode<synchronous>, transform_indices = @transform_2, window_bounds = array<i64: 256, 4>}, {pipeline_mode = #tpu.pipeline_mode<synchronous>, transform_indices = @transform_3, window_bounds = array<i64: 256, 4>}, {transform_indices = @transform_4, window_bounds = array<i64: 4, 256, 64>}, {transform_indices = @transform_5, window_bounds = array<i64: 256, 4>}, {transform_indices = @transform_6, window_bounds = array<i64: 4, 256>}]} {
    %c0 = arith.constant 0 : index
    %c0_0 = arith.constant 0 : index
    %0 = vector.load %arg1[%c0, %c0_0] : memref<256x32xf32, #tpu.memory_space<vmem>>, vector<256x32xf32>
    %1 = arith.truncf %0 : vector<256x32xf32> to vector<256x32xbf16>
    %c0_1 = arith.constant 0 : index
    %c0_2 = arith.constant 0 : index
    %2 = vector.load %arg2[%c0_1, %c0_2] : memref<32x256xf32, #tpu.memory_space<vmem>>, vector<32x256xf32>
    %3 = arith.truncf %2 : vector<32x256xf32> to vector<32x256xbf16>
    %cst = arith.constant dense<0.000000e+00> : vector<256x256xf32>
    %4 = tpu.matmul %1, %3, %cst {dimension_numbers = #tpu.dot_dimension_numbers<[1], [0], [0], [1], [0, 0, 1, 1], [], []>} : vector<256x32xbf16>, vector<32x256xbf16>, vector<256x256xf32> -> vector<256x256xf32>
    %c0_3 = arith.constant 0 : index
    %c0_4 = arith.constant 0 : index
    %5 = vector.load %arg3[%c0_3, %c0_4] : memref<256x4xf32, #tpu.memory_space<vmem>>, vector<256x4xf32>
    %cst_5 = arith.constant dense<0.000000e+00> : vector<256x4xf32>
    %6 = tpu.matmul %4, %5, %cst_5 {dimension_numbers = #tpu.dot_dimension_numbers<[1], [0], [0], [1], [0, 0, 1, 1], [], []>} : vector<256x256xf32>, vector<256x4xf32>, vector<256x4xf32> -> vector<256x4xf32>
    %c0_6 = arith.constant 0 : index
    %c0_7 = arith.constant 0 : index
    %7 = vector.load %arg6[%c0_6, %c0_7] : memref<256x4xf32, #tpu.memory_space<vmem>>, vector<256x4xf32>
    tpu.vector_store %arg6[%c0_6, %c0_7], %6 {strides = array<i32>} : memref<256x4xf32, #tpu.memory_space<vmem>>, vector<256x4xf32>,
    %c0_8 = arith.constant 0 : index
    %c0_9 = arith.constant 0 : index
    %8 = vector.load %arg4[%c0_8, %c0_9] : memref<256x4xf32, #tpu.memory_space<vmem>>, vector<256x4xf32>
    %cst_10 = arith.constant dense<0.000000e+00> : vector<256x4xf32>
    %9 = tpu.matmul %4, %8, %cst_10 {dimension_numbers = #tpu.dot_dimension_numbers<[1], [0], [0], [1], [0, 0, 1, 1], [], []>} : vector<256x256xf32>, vector<256x4xf32>, vector<256x4xf32> -> vector<256x4xf32>
    %10 = tpu.transpose %9, [1, 0] : vector<256x4xf32> -> vector<4x256xf32>
    %c0_11 = arith.constant 0 : index
    %c0_12 = arith.constant 0 : index
    %11 = vector.load %arg7[%c0_11, %c0_12] : memref<4x256xf32, #tpu.memory_space<vmem>>, vector<4x256xf32>
    tpu.vector_store %arg7[%c0_11, %c0_12], %10 {strides = array<i32>} : memref<4x256xf32, #tpu.memory_space<vmem>>, vector<4x256xf32>,
    %12 = vector.extract_strided_slice %4 {offsets = [0, 0], sizes = [256, 64], strides = [1, 1]} : vector<256x256xf32> to vector<256x64xf32>
    %13 = arith.truncf %12 : vector<256x64xf32> to vector<256x64xbf16>
    %c0_13 = arith.constant 0 : index
    %c0_14 = arith.constant 0 : index
    %c0_15 = arith.constant 0 : index
    %14 = vector.load %arg5[%c0_13, %c0_14, %c0_15] : memref<4x256x64xbf16, #tpu.memory_space<vmem>>, vector<1x256x64xbf16>
    %15 = vector.shape_cast %14 : vector<1x256x64xbf16> to vector<256x64xbf16>
    %16 = vector.shape_cast %13 : vector<256x64xbf16> to vector<1x256x64xbf16>
    tpu.vector_store %arg5[%c0_13, %c0_14, %c0_15], %16 {strides = array<i32>} : memref<4x256x64xbf16, #tpu.memory_space<vmem>>, vector<1x256x64xbf16>,
    %17 = vector.extract_strided_slice %4 {offsets = [0, 64], sizes = [256, 64], strides = [1, 1]} : vector<256x256xf32> to vector<256x64xf32>
    %18 = arith.truncf %17 : vector<256x64xf32> to vector<256x64xbf16>
    %c1 = arith.constant 1 : index
    %c0_16 = arith.constant 0 : index
    %c0_17 = arith.constant 0 : index
    %19 = vector.load %arg5[%c1, %c0_16, %c0_17] : memref<4x256x64xbf16, #tpu.memory_space<vmem>>, vector<1x256x64xbf16>
    %20 = vector.shape_cast %19 : vector<1x256x64xbf16> to vector<256x64xbf16>
    %21 = vector.shape_cast %18 : vector<256x64xbf16> to vector<1x256x64xbf16>
    tpu.vector_store %arg5[%c1, %c0_16, %c0_17], %21 {strides = array<i32>} : memref<4x256x64xbf16, #tpu.memory_space<vmem>>, vector<1x256x64xbf16>,
    %22 = vector.extract_strided_slice %4 {offsets = [0, 128], sizes = [256, 64], strides = [1, 1]} : vector<256x256xf32> to vector<256x64xf32>
    %23 = arith.truncf %22 : vector<256x64xf32> to vector<256x64xbf16>
    %c2 = arith.constant 2 : index
    %c0_18 = arith.constant 0 : index
    %c0_19 = arith.constant 0 : index
    %24 = vector.load %arg5[%c2, %c0_18, %c0_19] : memref<4x256x64xbf16, #tpu.memory_space<vmem>>, vector<1x256x64xbf16>
    %25 = vector.shape_cast %24 : vector<1x256x64xbf16> to vector<256x64xbf16>
    %26 = vector.shape_cast %23 : vector<256x64xbf16> to vector<1x256x64xbf16>
    tpu.vector_store %arg5[%c2, %c0_18, %c0_19], %26 {strides = array<i32>} : memref<4x256x64xbf16, #tpu.memory_space<vmem>>, vector<1x256x64xbf16>,
    %27 = vector.extract_strided_slice %4 {offsets = [0, 192], sizes = [256, 64], strides = [1, 1]} : vector<256x256xf32> to vector<256x64xf32>
    %28 = arith.truncf %27 : vector<256x64xf32> to vector<256x64xbf16>
    %c3 = arith.constant 3 : index
    %c0_20 = arith.constant 0 : index
    %c0_21 = arith.constant 0 : index
    %29 = vector.load %arg5[%c3, %c0_20, %c0_21] : memref<4x256x64xbf16, #tpu.memory_space<vmem>>, vector<1x256x64xbf16>
    %30 = vector.shape_cast %29 : vector<1x256x64xbf16> to vector<256x64xbf16>
    %31 = vector.shape_cast %28 : vector<256x64xbf16> to vector<1x256x64xbf16>
    tpu.vector_store %arg5[%c3, %c0_20, %c0_21], %31 {strides = array<i32>} : memref<4x256x64xbf16, #tpu.memory_space<vmem>>, vector<1x256x64xbf16>,
    return
  }
  func.func @transform_0(%arg0: i32) -> (i32, i32) {
    %c0_i32 = arith.constant 0 : i32
    %c0_i32_0 = arith.constant 0 : i32
    return %arg0, %c0_i32 : i32, i32
  }
  func.func @transform_1(%arg0: i32) -> (i32, i32) {
    %c0_i32 = arith.constant 0 : i32
    %c0_i32_0 = arith.constant 0 : i32
    %c0_i32_1 = arith.constant 0 : i32
    return %c0_i32, %c0_i32_0 : i32, i32
  }
  func.func @transform_2(%arg0: i32) -> (i32, i32) {
    %c0_i32 = arith.constant 0 : i32
    %c0_i32_0 = arith.constant 0 : i32
    %c0_i32_1 = arith.constant 0 : i32
    return %c0_i32, %c0_i32_0 : i32, i32
  }
  func.func @transform_3(%arg0: i32) -> (i32, i32) {
    %c0_i32 = arith.constant 0 : i32
    %c0_i32_0 = arith.constant 0 : i32
    %c0_i32_1 = arith.constant 0 : i32
    return %c0_i32, %c0_i32_0 : i32, i32
  }
  func.func @transform_4(%arg0: i32) -> (i32, i32, i32) {
    %c0_i32 = arith.constant 0 : i32
    %c0_i32_0 = arith.constant 0 : i32
    %c0_i32_1 = arith.constant 0 : i32
    return %c0_i32, %arg0, %c0_i32_0 : i32, i32, i32
  }
  func.func @transform_5(%arg0: i32) -> (i32, i32) {
    %c0_i32 = arith.constant 0 : i32
    %c0_i32_0 = arith.constant 0 : i32
    return %arg0, %c0_i32 : i32, i32
  }
  func.func @transform_6(%arg0: i32) -> (i32, i32) {
    %c0_i32 = arith.constant 0 : i32
    %c0_i32_0 = arith.constant 0 : i32
    return %c0_i32, %arg0 : i32, i32
  }
}

</mosaic_0001>

<llo_original>
// kernel: tpu_custom_call.1
$region0: #{tpu_custom_call.1}
  #allocation0 [shape = 'u32[]', space=smem, size = 0x4, offset = 0x4, fixed_abs, tag = 'smem constant byte address 0x4 - core index']
  #allocation1 [shape = 'u32[144,128]{1,0:T(1,128)}', space=vmem, size = 0x12000, scoped, tag = 'internal scratch']
  %s0 = inlined_call_operand.vmem [shape: f32[256,32], index: 0, kind: input, shape index: {}]
  %s1 = inlined_call_operand.vmem [shape: f32[32,256], index: 1, kind: input, shape index: {}]
  %s2 = inlined_call_operand.vmem [shape: f32[256,4], index: 2, kind: input, shape index: {}]
  %s3 = inlined_call_operand.vmem [shape: f32[256,4], index: 3, kind: input, shape index: {}]
  %s4 = inlined_call_operand.vmem [shape: bf16[4,256,64], index: 4, kind: output, shape index: {0}]
  %s5 = inlined_call_operand.vmem [shape: f32[256,4], index: 5, kind: output, shape index: {1}]
  %s6 = inlined_call_operand.hbm [shape: f32[4,256], index: 6, kind: output, shape index: {2}]
  %7 = xla_tuple %s4, %s5, %s6
  %s8 = sld [smem:[#allocation0]]
  $region42: #{tpu_custom_call.1} parent=0
    _
  %s10 = ssub.s32 1, %s8
  %s11 = scalar_select 0, %s10, %s8
  $region1: #{tpu_custom_call.1} parent=0
    #allocation2 [shape = 'u8[4096]{0}', space=vmem, size = 0x1000, scoped, tag = 'output window, operand 2, single buffered']
    #allocation3 [shape = 's32[1]{0}', space=sflag, size = 0x4, scoped, tag = 'scoped memory for tpu_custom_call.1']
    %12 = vsyncpa [#allocation3], 0
    // Predicated region
    $region2: #{tpu_custom_call.1} parent=1 // pred_check
      _
    $region3: #{tpu_custom_call.1} parent=1 // pred_check_branch
      %14 = sbr.rel (0) target = $region5
    $region4: #{tpu_custom_call.1} parent=1 // pred_region
      _
    $region5: #{tpu_custom_call.1} parent=1 // pred_fallthru
      _
    // Predicated region
    $region6: #{tpu_custom_call.1} parent=1 // pred_check
      _
    $region7: #{tpu_custom_call.1} parent=1 // pred_check_branch
      %16 = sbr.rel (0) target = $region9
    $region8: #{tpu_custom_call.1} parent=1 // pred_region
      _
    $region9: #{tpu_custom_call.1} parent=1 // pred_fallthru
      _
    // Predicated region
    $region10: #{tpu_custom_call.1} parent=1 // pred_check
      _
    $region11: #{tpu_custom_call.1} parent=1 // pred_check_branch
      %18 = sbr.rel (0) target = $region13
    $region12: #{tpu_custom_call.1} parent=1 // pred_region
      _
    $region13: #{tpu_custom_call.1} parent=1 // pred_fallthru
      _
    // Predicated region
    $region14: #{tpu_custom_call.1} parent=1 // pred_check
      _
    $region15: #{tpu_custom_call.1} parent=1 // pred_check_branch
      %20 = sbr.rel (0) target = $region17
    $region16: #{tpu_custom_call.1} parent=1 // pred_region
      _
    $region17: #{tpu_custom_call.1} parent=1 // pred_fallthru
      _
    %v22 = vld [vmem:[%s0] sm:$0xff]
    %v23 = vld [vmem:[%s0 + $0x8] sm:$0xff]
    %v24 = vld [vmem:[%s0 + $0x10] sm:$0xff]
    %v25 = vld [vmem:[%s0 + $0x18] sm:$0xff]
    %v26 = vld [vmem:[%s0 + $0x20] sm:$0xff]
    %v27 = vld [vmem:[%s0 + $0x28] sm:$0xff]
    %v28 = vld [vmem:[%s0 + $0x30] sm:$0xff]
    %v29 = vld [vmem:[%s0 + $0x38] sm:$0xff]
    %v30 = vld [vmem:[%s0 + $0x40] sm:$0xff]
    %v31 = vld [vmem:[%s0 + $0x48] sm:$0xff]
    %v32 = vld [vmem:[%s0 + $0x50] sm:$0xff]
    %v33 = vld [vmem:[%s0 + $0x58] sm:$0xff]
    %v34 = vld [vmem:[%s0 + $0x60] sm:$0xff]
    %v35 = vld [vmem:[%s0 + $0x68] sm:$0xff]
    %v36 = vld [vmem:[%s0 + $0x70] sm:$0xff]
    %v37 = vld [vmem:[%s0 + $0x78] sm:$0xff]
    %v38 = vld [vmem:[%s0 + $0x80] sm:$0xff]
    %v39 = vld [vmem:[%s0 + $0x88] sm:$0xff]
    %v40 = vld [vmem:[%s0 + $0x90] sm:$0xff]
    %v41 = vld [vmem:[%s0 + $0x98] sm:$0xff]
    %v42 = vld [vmem:[%s0 + $0xa0] sm:$0xff]
    %v43 = vld [vmem:[%s0 + $0xa8] sm:$0xff]
    %v44 = vld [vmem:[%s0 + $0xb0] sm:$0xff]
    %v45 = vld [vmem:[%s0 + $0xb8] sm:$0xff]
    %v46 = vld [vmem:[%s0 + $0xc0] sm:$0xff]
    %v47 = vld [vmem:[%s0 + $0xc8] sm:$0xff]
    %v48 = vld [vmem:[%s0 + $0xd0] sm:$0xff]
    %v49 = vld [vmem:[%s0 + $0xd8] sm:$0xff]
    %v50 = vld [vmem:[%s0 + $0xe0] sm:$0xff]
    %v51 = vld [vmem:[%s0 + $0xe8] sm:$0xff]
    %v52 = vld [vmem:[%s0 + $0xf0] sm:$0xff]
    %v53 = vld [vmem:[%s0 + $0xf8] sm:$0xff]
    %v54 = vpack.c.bf16 %v23, %v22
    %v55 = vpack.c.bf16 %v25, %v24
    %v56 = vpack.c.bf16 %v27, %v26
    %v57 = vpack.c.bf16 %v29, %v28
    %v58 = vpack.c.bf16 %v31, %v30
    %v59 = vpack.c.bf16 %v33, %v32
    %v60 = vpack.c.bf16 %v35, %v34
    %v61 = vpack.c.bf16 %v37, %v36
    %v62 = vpack.c.bf16 %v39, %v38
    %v63 = vpack.c.bf16 %v41, %v40
    %v64 = vpack.c.bf16 %v43, %v42
    %v65 = vpack.c.bf16 %v45, %v44
    %v66 = vpack.c.bf16 %v47, %v46
    %v67 = vpack.c.bf16 %v49, %v48
    %v68 = vpack.c.bf16 %v51, %v50
    %v69 = vpack.c.bf16 %v53, %v52
    %v70 = vld [vmem:[%s1] sm:$0xff]
    %v71 = vld [vmem:[%s1 + $0x8] sm:$0xff]
    %v72 = vld [vmem:[%s1 + $0x10] sm:$0xff]
    %v73 = vld [vmem:[%s1 + $0x18] sm:$0xff]
    %v74 = vld [vmem:[%s1 + $0x20] sm:$0xff]
    %v75 = vld [vmem:[%s1 + $0x28] sm:$0xff]
    %v76 = vld [vmem:[%s1 + $0x30] sm:$0xff]
    %v77 = vld [vmem:[%s1 + $0x38] sm:$0xff]
    %v78 = vpack.c.bf16 %v72, %v70
    %v79 = vpack.c.bf16 %v73, %v71
    %v80 = vpack.c.bf16 %v76, %v74
    %v81 = vpack.c.bf16 %v77, %v75
    %vm82 = vcmask 261120
    %v84 = vsel %vm82, %v54, 0
    %v87 = vsel %vm82, %v55, 0
    %v90 = vsel %vm82, %v56, 0
    %v93 = vsel %vm82, %v57, 0
    %v96 = vsel %vm82, %v58, 0
    %v99 = vsel %vm82, %v59, 0
    %v102 = vsel %vm82, %v60, 0
    %v105 = vsel %vm82, %v61, 0
    %v108 = vsel %vm82, %v62, 0
    %v111 = vsel %vm82, %v63, 0
    %v114 = vsel %vm82, %v64, 0
    %v117 = vsel %vm82, %v65, 0
    %v120 = vsel %vm82, %v66, 0
    %v123 = vsel %vm82, %v67, 0
    %v126 = vsel %vm82, %v68, 0
    %v129 = vsel %vm82, %v69, 0
    %131 = vmatprep.subr.bf16.mxu0 0
    %132 = vmatpush1.bf16.msra.mxu0 0
    %133 = vmatprep.subr.bf16.mxu0 0
    %134 = vmatpush1.bf16.msra.mxu0 0
    %135 = vmatprep.subr.bf16.mxu0 0
    %136 = vmatpush1.bf16.msra.mxu0 0
    %137 = vmatprep.subr.bf16.mxu0 0
    %138 = vmatpush1.bf16.msra.mxu0 0
    %139 = vmatprep.subr.bf16.mxu0 0
    %140 = vmatpush1.bf16.msra.mxu0 0
    %141 = vmatprep.subr.bf16.mxu0 0
    %142 = vmatpush1.bf16.msra.mxu0 0
    %143 = vmatprep.subr.bf16.mxu0 %v81
    %144 = vmatpush1.bf16.msra.mxu0 %v80
    %145 = vmatprep.subr.bf16.mxu0 %v79
    %146 = vmatpush1.bf16.msra.mxu0 %v78
    %147 = vmatprep.subr.bf16.mxu0 0
    %148 = vmatpush2.bf16.msra.mxu0 0
    %149 = vmatprep.subr.bf16.mxu0 0
    %150 = vmatpush2.bf16.msra.mxu0 0
    %151 = vmatprep.subr.bf16.mxu0 0
    %152 = vmatpush2.bf16.msra.mxu0 0
    %153 = vmatprep.subr.bf16.mxu0 0
    %154 = vmatpush2.bf16.msra.mxu0 0
    %155 = vmatprep.subr.bf16.mxu0 0
    %156 = vmatpush2.bf16.msra.mxu0 0
    %157 = vmatprep.subr.bf16.mxu0 0
    %158 = vmatpush2.bf16.msra.mxu0 0
    %159 = vmatprep.subr.bf16.mxu0 0
    %160 = vmatpush2.bf16.msra.mxu0 0
    %161 = vmatprep.subr.bf16.mxu0 0
    %162 = vmatpush2.bf16.msra.mxu0 0
    %163 = vmatprep.mubr.bf16.mxu0 0
    %164 = vmatmul.mubr.bf16.gmra.mxu0 %v84
    %v165 = vpop.f32.mrf.mxu0
    %v166 = vadd.f32 0.0, %v165
    %v167 = vpop.f32.mrf.mxu0
    %v168 = vadd.f32 0.0, %v167
    %v169 = vpop.f32.mrf.mxu0
    %v170 = vadd.f32 0.0, %v169
    %v171 = vpop.f32.mrf.mxu0
    %v172 = vadd.f32 0.0, %v171
    %173 = vmatprep.mubr.bf16.mxu0 0
    %174 = vmatmul.mubr.bf16.gmra.mxu0 %v87
    %v175 = vpop.f32.mrf.mxu0
    %v176 = vadd.f32 0.0, %v175
    %v177 = vpop.f32.mrf.mxu0
    %v178 = vadd.f32 0.0, %v177
    %v179 = vpop.f32.mrf.mxu0
    %v180 = vadd.f32 0.0, %v179
    %v181 = vpop.f32.mrf.mxu0
    %v182 = vadd.f32 0.0, %v181
    %183 = vmatprep.mubr.bf16.mxu0 0
    %184 = vmatmul.mubr.bf16.gmra.mxu0 %v90
    %v185 = vpop.f32.mrf.mxu0
    %v186 = vadd.f32 0.0, %v185
    %v187 = vpop.f32.mrf.mxu0
    %v188 = vadd.f32 0.0, %v187
    %v189 = vpop.f32.mrf.mxu0
    %v190 = vadd.f32 0.0, %v189
    %v191 = vpop.f32.mrf.mxu0
    %v192 = vadd.f32 0.0, %v191
    %193 = vmatprep.mubr.bf16.mxu0 0
    %194 = vmatmul.mubr.bf16.gmra.mxu0 %v93
    %v195 = vpop.f32.mrf.mxu0
    %v196 = vadd.f32 0.0, %v195
    %v197 = vpop.f32.mrf.mxu0
    %v198 = vadd.f32 0.0, %v197
    %v199 = vpop.f32.mrf.mxu0
    %v200 = vadd.f32 0.0, %v199
    %v201 = vpop.f32.mrf.mxu0
    %v202 = vadd.f32 0.0, %v201
    %203 = vmatprep.mubr.bf16.mxu0 0
    %204 = vmatmul.mubr.bf16.gmra.mxu0 %v96
    %v205 = vpop.f32.mrf.mxu0
    %v206 = vadd.f32 0.0, %v205
    %v207 = vpop.f32.mrf.mxu0
    %v208 = vadd.f32 0.0, %v207
    %v209 = vpop.f32.mrf.mxu0
    %v210 = vadd.f32 0.0, %v209
    %v211 = vpop.f32.mrf.mxu0
    %v212 = vadd.f32 0.0, %v211
    %213 = vmatprep.mubr.bf16.mxu0 0
    %214 = vmatmul.mubr.bf16.gmra.mxu0 %v99
    %v215 = vpop.f32.mrf.mxu0
    %v216 = vadd.f32 0.0, %v215
    %v217 = vpop.f32.mrf.mxu0
    %v218 = vadd.f32 0.0, %v217
    %v219 = vpop.f32.mrf.mxu0
    %v220 = vadd.f32 0.0, %v219
    %v221 = vpop.f32.mrf.mxu0
    %v222 = vadd.f32 0.0, %v221
    %223 = vmatprep.mubr.bf16.mxu0 0
    %224 = vmatmul.mubr.bf16.gmra.mxu0 %v102
    %v225 = vpop.f32.mrf.mxu0
    %v226 = vadd.f32 0.0, %v225
    %v227 = vpop.f32.mrf.mxu0
    %v228 = vadd.f32 0.0, %v227
    %v229 = vpop.f32.mrf.mxu0
    %v230 = vadd.f32 0.0, %v229
    %v231 = vpop.f32.mrf.mxu0
    %v232 = vadd.f32 0.0, %v231
    %233 = vmatprep.mubr.bf16.mxu0 0
    %234 = vmatmul.mubr.bf16.gmra.mxu0 %v105
    %v235 = vpop.f32.mrf.mxu0
    %v236 = vadd.f32 0.0, %v235
    %v237 = vpop.f32.mrf.mxu0
    %v238 = vadd.f32 0.0, %v237
    %v239 = vpop.f32.mrf.mxu0
    %v240 = vadd.f32 0.0, %v239
    %v241 = vpop.f32.mrf.mxu0
    %v242 = vadd.f32 0.0, %v241
    %243 = vmatprep.mubr.bf16.mxu0 0
    %244 = vmatmul.mubr.bf16.gmra.mxu0 %v108
    %v245 = vpop.f32.mrf.mxu0
    %v246 = vadd.f32 0.0, %v245
    %v247 = vpop.f32.mrf.mxu0
    %v248 = vadd.f32 0.0, %v247
    %v249 = vpop.f32.mrf.mxu0
    %v250 = vadd.f32 0.0, %v249
    %v251 = vpop.f32.mrf.mxu0
    %v252 = vadd.f32 0.0, %v251
    %253 = vmatprep.mubr.bf16.mxu0 0
    %254 = vmatmul.mubr.bf16.gmra.mxu0 %v111
    %v255 = vpop.f32.mrf.mxu0
    %v256 = vadd.f32 0.0, %v255
    %v257 = vpop.f32.mrf.mxu0
    %v258 = vadd.f32 0.0, %v257
    %v259 = vpop.f32.mrf.mxu0
    %v260 = vadd.f32 0.0, %v259
    %v261 = vpop.f32.mrf.mxu0
    %v262 = vadd.f32 0.0, %v261
    %263 = vmatprep.mubr.bf16.mxu0 0
    %264 = vmatmul.mubr.bf16.gmra.mxu0 %v114
    %v265 = vpop.f32.mrf.mxu0
    %v266 = vadd.f32 0.0, %v265
    %v267 = vpop.f32.mrf.mxu0
    %v268 = vadd.f32 0.0, %v267
    %v269 = vpop.f32.mrf.mxu0
    %v270 = vadd.f32 0.0, %v269
    %v271 = vpop.f32.mrf.mxu0
    %v272 = vadd.f32 0.0, %v271
    %273 = vmatprep.mubr.bf16.mxu0 0
    %274 = vmatmul.mubr.bf16.gmra.mxu0 %v117
    %v275 = vpop.f32.mrf.mxu0
    %v276 = vadd.f32 0.0, %v275
    %v277 = vpop.f32.mrf.mxu0
    %v278 = vadd.f32 0.0, %v277
    %v279 = vpop.f32.mrf.mxu0
    %v280 = vadd.f32 0.0, %v279
    %v281 = vpop.f32.mrf.mxu0
    %v282 = vadd.f32 0.0, %v281
    %283 = vmatprep.mubr.bf16.mxu0 0
    %284 = vmatmul.mubr.bf16.gmra.mxu0 %v120
    %v285 = vpop.f32.mrf.mxu0
    %v286 = vadd.f32 0.0, %v285
    %v287 = vpop.f32.mrf.mxu0
    %v288 = vadd.f32 0.0, %v287
    %v289 = vpop.f32.mrf.mxu0
    %v290 = vadd.f32 0.0, %v289
    %v291 = vpop.f32.mrf.mxu0
    %v292 = vadd.f32 0.0, %v291
    %293 = vmatprep.mubr.bf16.mxu0 0
    %294 = vmatmul.mubr.bf16.gmra.mxu0 %v123
    %v295 = vpop.f32.mrf.mxu0
    %v296 = vadd.f32 0.0, %v295
    %v297 = vpop.f32.mrf.mxu0
    %v298 = vadd.f32 0.0, %v297
    %v299 = vpop.f32.mrf.mxu0
    %v300 = vadd.f32 0.0, %v299
    %v301 = vpop.f32.mrf.mxu0
    %v302 = vadd.f32 0.0, %v301
    %303 = vmatprep.mubr.bf16.mxu0 0
    %304 = vmatmul.mubr.bf16.gmra.mxu0 %v126
    %v305 = vpop.f32.mrf.mxu0
    %v306 = vadd.f32 0.0, %v305
    %v307 = vpop.f32.mrf.mxu0
    %v308 = vadd.f32 0.0, %v307
    %v309 = vpop.f32.mrf.mxu0
    %v310 = vadd.f32 0.0, %v309
    %v311 = vpop.f32.mrf.mxu0
    %v312 = vadd.f32 0.0, %v311
    %313 = vmatprep.mubr.bf16.mxu0 0
    %314 = vmatmul.mubr.bf16.gmra.mxu0 %v129
    %v315 = vpop.f32.mrf.mxu0
    %v316 = vadd.f32 0.0, %v315
    %v317 = vpop.f32.mrf.mxu0
    %v318 = vadd.f32 0.0, %v317
    %v319 = vpop.f32.mrf.mxu0
    %v320 = vadd.f32 0.0, %v319
    %v321 = vpop.f32.mrf.mxu0
    %v322 = vadd.f32 0.0, %v321
    %323 = vdwg.mxu0
    %v324 = vld [vmem:[%s2] sm:$0xff]
    %v325 = vld [vmem:[%s2 + $0x8] sm:$0xff]
    %v326 = vld [vmem:[%s2 + $0x10] sm:$0xff]
    %v327 = vld [vmem:[%s2 + $0x18] sm:$0xff]
    %v328 = vld [vmem:[%s2 + $0x20] sm:$0xff]
    %v329 = vld [vmem:[%s2 + $0x28] sm:$0xff]
    %v330 = vld [vmem:[%s2 + $0x30] sm:$0xff]
    %v331 = vld [vmem:[%s2 + $0x38] sm:$0xff]
    %v332 = vld [vmem:[%s2 + $0x40] sm:$0xff]
    %v333 = vld [vmem:[%s2 + $0x48] sm:$0xff]
    %v334 = vld [vmem:[%s2 + $0x50] sm:$0xff]
    %v335 = vld [vmem:[%s2 + $0x58] sm:$0xff]
    %v336 = vld [vmem:[%s2 + $0x60] sm:$0xff]
    %v337 = vld [vmem:[%s2 + $0x68] sm:$0xff]
    %v338 = vld [vmem:[%s2 + $0x70] sm:$0xff]
    %v339 = vld [vmem:[%s2 + $0x78] sm:$0xff]
    %v340 = vld [vmem:[%s2 + $0x80] sm:$0xff]
    %v341 = vld [vmem:[%s2 + $0x88] sm:$0xff]
    %v342 = vld [vmem:[%s2 + $0x90] sm:$0xff]
    %v343 = vld [vmem:[%s2 + $0x98] sm:$0xff]
    %v344 = vld [vmem:[%s2 + $0xa0] sm:$0xff]
    %v345 = vld [vmem:[%s2 + $0xa8] sm:$0xff]
    %v346 = vld [vmem:[%s2 + $0xb0] sm:$0xff]
    %v347 = vld [vmem:[%s2 + $0xb8] sm:$0xff]
    %v348 = vld [vmem:[%s2 + $0xc0] sm:$0xff]
    %v349 = vld [vmem:[%s2 + $0xc8] sm:$0xff]
    %v350 = vld [vmem:[%s2 + $0xd0] sm:$0xff]
    %v351 = vld [vmem:[%s2 + $0xd8] sm:$0xff]
    %v352 = vld [vmem:[%s2 + $0xe0] sm:$0xff]
    %v353 = vld [vmem:[%s2 + $0xe8] sm:$0xff]
    %v354 = vld [vmem:[%s2 + $0xf0] sm:$0xff]
    %v355 = vld [vmem:[%s2 + $0xf8] sm:$0xff]
    %356 = vmatprep.subr.mxu0 0.0
    %357 = vmatpush1.msra.mxu0 %v339
    %358 = vmatprep.subr.mxu0 0.0
    %359 = vmatpush1.msra.mxu0 %v338
    %360 = vmatprep.subr.mxu0 0.0
    %361 = vmatpush1.msra.mxu0 %v337
    %362 = vmatprep.subr.mxu0 0.0
    %363 = vmatpush1.msra.mxu0 %v336
    %364 = vmatprep.subr.mxu0 0.0
    %365 = vmatpush1.msra.mxu0 %v335
    %366 = vmatprep.subr.mxu0 0.0
    %367 = vmatpush1.msra.mxu0 %v334
    %368 = vmatprep.subr.mxu0 0.0
    %369 = vmatpush1.msra.mxu0 %v333
    %370 = vmatprep.subr.mxu0 0.0
    %371 = vmatpush1.msra.mxu0 %v332
    %372 = vmatprep.subr.mxu0 0.0
    %373 = vmatpush1.msra.mxu0 %v331
    %374 = vmatprep.subr.mxu0 0.0
    %375 = vmatpush1.msra.mxu0 %v330
    %376 = vmatprep.subr.mxu0 0.0
    %377 = vmatpush1.msra.mxu0 %v329
    %378 = vmatprep.subr.mxu0 0.0
    %379 = vmatpush1.msra.mxu0 %v328
    %380 = vmatprep.subr.mxu0 0.0
    %381 = vmatpush1.msra.mxu0 %v327
    %382 = vmatprep.subr.mxu0 0.0
    %383 = vmatpush1.msra.mxu0 %v326
    %384 = vmatprep.subr.mxu0 0.0
    %385 = vmatpush1.msra.mxu0 %v325
    %386 = vmatprep.subr.mxu0 0.0
    %387 = vmatpush1.msra.mxu0 %v324
    %388 = vmatprep.subr.mxu0 0.0
    %389 = vmatpush2.msra.mxu0 %v355
    %390 = vmatprep.subr.mxu0 0.0
    %391 = vmatpush2.msra.mxu0 %v354
    %392 = vmatprep.subr.mxu0 0.0
    %393 = vmatpush2.msra.mxu0 %v353
    %394 = vmatprep.subr.mxu0 0.0
    %395 = vmatpush2.msra.mxu0 %v352
    %396 = vmatprep.subr.mxu0 0.0
    %397 = vmatpush2.msra.mxu0 %v351
    %398 = vmatprep.subr.mxu0 0.0
    %399 = vmatpush2.msra.mxu0 %v350
    %400 = vmatprep.subr.mxu0 0.0
    %401 = vmatpush2.msra.mxu0 %v349
    %402 = vmatprep.subr.mxu0 0.0
    %403 = vmatpush2.msra.mxu0 %v348
    %404 = vmatprep.subr.mxu0 0.0
    %405 = vmatpush2.msra.mxu0 %v347
    %406 = vmatprep.subr.mxu0 0.0
    %407 = vmatpush2.msra.mxu0 %v346
    %408 = vmatprep.subr.mxu0 0.0
    %409 = vmatpush2.msra.mxu0 %v345
    %410 = vmatprep.subr.mxu0 0.0
    %411 = vmatpush2.msra.mxu0 %v344
    %412 = vmatprep.subr.mxu0 0.0
    %413 = vmatpush2.msra.mxu0 %v343
    %414 = vmatprep.subr.mxu0 0.0
    %415 = vmatpush2.msra.mxu0 %v342
    %416 = vmatprep.subr.mxu0 0.0
    %417 = vmatpush2.msra.mxu0 %v341
    %418 = vmatprep.subr.mxu0 0.0
    %419 = vmatpush2.msra.mxu0 %v340
    %420 = vmatprep.mubr.f32.mxu0 %v168
    %421 = vmatmul.mubr.f32.gmra.mxu0 %v166
    %v422 = vpop.f32.mrf.mxu0
    %v423 = vadd.f32 0.0, %v422
    %v424 = vpop.f32.mrf.mxu0
    %425 = vmatprep.mubr.f32.mxu0 %v172
    %426 = vmatmul.mubr.f32.gmra.mxu0 %v170
    %v427 = vpop.f32.mrf.mxu0
    %v428 = vadd.f32 0.0, %v427
    %v429 = vpop.f32.mrf.mxu0
    %430 = vmatprep.mubr.f32.mxu0 %v178
    %431 = vmatmul.mubr.f32.gmra.mxu0 %v176
    %v432 = vpop.f32.mrf.mxu0
    %v433 = vadd.f32 0.0, %v432
    %v434 = vpop.f32.mrf.mxu0
    %435 = vmatprep.mubr.f32.mxu0 %v182
    %436 = vmatmul.mubr.f32.gmra.mxu0 %v180
    %v437 = vpop.f32.mrf.mxu0
    %v438 = vadd.f32 0.0, %v437
    %v439 = vpop.f32.mrf.mxu0
    %440 = vmatprep.mubr.f32.mxu0 %v188
    %441 = vmatmul.mubr.f32.gmra.mxu0 %v186
    %v442 = vpop.f32.mrf.mxu0
    %v443 = vadd.f32 0.0, %v442
    %v444 = vpop.f32.mrf.mxu0
    %445 = vmatprep.mubr.f32.mxu0 %v192
    %446 = vmatmul.mubr.f32.gmra.mxu0 %v190
    %v447 = vpop.f32.mrf.mxu0
    %v448 = vadd.f32 0.0, %v447
    %v449 = vpop.f32.mrf.mxu0
    %450 = vmatprep.mubr.f32.mxu0 %v198
    %451 = vmatmul.mubr.f32.gmra.mxu0 %v196
    %v452 = vpop.f32.mrf.mxu0
    %v453 = vadd.f32 0.0, %v452
    %v454 = vpop.f32.mrf.mxu0
    %455 = vmatprep.mubr.f32.mxu0 %v202
    %456 = vmatmul.mubr.f32.gmra.mxu0 %v200
    %v457 = vpop.f32.mrf.mxu0
    %v458 = vadd.f32 0.0, %v457
    %v459 = vpop.f32.mrf.mxu0
    %460 = vmatprep.mubr.f32.mxu0 %v208
    %461 = vmatmul.mubr.f32.gmra.mxu0 %v206
    %v462 = vpop.f32.mrf.mxu0
    %v463 = vadd.f32 0.0, %v462
    %v464 = vpop.f32.mrf.mxu0
    %465 = vmatprep.mubr.f32.mxu0 %v212
    %466 = vmatmul.mubr.f32.gmra.mxu0 %v210
    %v467 = vpop.f32.mrf.mxu0
    %v468 = vadd.f32 0.0, %v467
    %v469 = vpop.f32.mrf.mxu0
    %470 = vmatprep.mubr.f32.mxu0 %v218
    %471 = vmatmul.mubr.f32.gmra.mxu0 %v216
    %v472 = vpop.f32.mrf.mxu0
    %v473 = vadd.f32 0.0, %v472
    %v474 = vpop.f32.mrf.mxu0
    %475 = vmatprep.mubr.f32.mxu0 %v222
    %476 = vmatmul.mubr.f32.gmra.mxu0 %v220
    %v477 = vpop.f32.mrf.mxu0
    %v478 = vadd.f32 0.0, %v477
    %v479 = vpop.f32.mrf.mxu0
    %480 = vmatprep.mubr.f32.mxu0 %v228
    %481 = vmatmul.mubr.f32.gmra.mxu0 %v226
    %v482 = vpop.f32.mrf.mxu0
    %v483 = vadd.f32 0.0, %v482
    %v484 = vpop.f32.mrf.mxu0
    %485 = vmatprep.mubr.f32.mxu0 %v232
    %486 = vmatmul.mubr.f32.gmra.mxu0 %v230
    %v487 = vpop.f32.mrf.mxu0
    %v488 = vadd.f32 0.0, %v487
    %v489 = vpop.f32.mrf.mxu0
    %490 = vmatprep.mubr.f32.mxu0 %v238
    %491 = vmatmul.mubr.f32.gmra.mxu0 %v236
    %v492 = vpop.f32.mrf.mxu0
    %v493 = vadd.f32 0.0, %v492
    %v494 = vpop.f32.mrf.mxu0
    %495 = vmatprep.mubr.f32.mxu0 %v242
    %496 = vmatmul.mubr.f32.gmra.mxu0 %v240
    %v497 = vpop.f32.mrf.mxu0
    %v498 = vadd.f32 0.0, %v497
    %v499 = vpop.f32.mrf.mxu0
    %500 = vmatprep.mubr.f32.mxu0 %v248
    %501 = vmatmul.mubr.f32.gmra.mxu0 %v246
    %v502 = vpop.f32.mrf.mxu0
    %v503 = vadd.f32 0.0, %v502
    %v504 = vpop.f32.mrf.mxu0
    %505 = vmatprep.mubr.f32.mxu0 %v252
    %506 = vmatmul.mubr.f32.gmra.mxu0 %v250
    %v507 = vpop.f32.mrf.mxu0
    %v508 = vadd.f32 0.0, %v507
    %v509 = vpop.f32.mrf.mxu0
    %510 = vmatprep.mubr.f32.mxu0 %v258
    %511 = vmatmul.mubr.f32.gmra.mxu0 %v256
    %v512 = vpop.f32.mrf.mxu0
    %v513 = vadd.f32 0.0, %v512
    %v514 = vpop.f32.mrf.mxu0
    %515 = vmatprep.mubr.f32.mxu0 %v262
    %516 = vmatmul.mubr.f32.gmra.mxu0 %v260
    %v517 = vpop.f32.mrf.mxu0
    %v518 = vadd.f32 0.0, %v517
    %v519 = vpop.f32.mrf.mxu0
    %520 = vmatprep.mubr.f32.mxu0 %v268
    %521 = vmatmul.mubr.f32.gmra.mxu0 %v266
    %v522 = vpop.f32.mrf.mxu0
    %v523 = vadd.f32 0.0, %v522
    %v524 = vpop.f32.mrf.mxu0
    %525 = vmatprep.mubr.f32.mxu0 %v272
    %526 = vmatmul.mubr.f32.gmra.mxu0 %v270
    %v527 = vpop.f32.mrf.mxu0
    %v528 = vadd.f32 0.0, %v527
    %v529 = vpop.f32.mrf.mxu0
    %530 = vmatprep.mubr.f32.mxu0 %v278
    %531 = vmatmul.mubr.f32.gmra.mxu0 %v276
    %v532 = vpop.f32.mrf.mxu0
    %v533 = vadd.f32 0.0, %v532
    %v534 = vpop.f32.mrf.mxu0
    %535 = vmatprep.mubr.f32.mxu0 %v282
    %536 = vmatmul.mubr.f32.gmra.mxu0 %v280
    %v537 = vpop.f32.mrf.mxu0
    %v538 = vadd.f32 0.0, %v537
    %v539 = vpop.f32.mrf.mxu0
    %540 = vmatprep.mubr.f32.mxu0 %v288
    %541 = vmatmul.mubr.f32.gmra.mxu0 %v286
    %v542 = vpop.f32.mrf.mxu0
    %v543 = vadd.f32 0.0, %v542
    %v544 = vpop.f32.mrf.mxu0
    %545 = vmatprep.mubr.f32.mxu0 %v292
    %546 = vmatmul.mubr.f32.gmra.mxu0 %v290
    %v547 = vpop.f32.mrf.mxu0
    %v548 = vadd.f32 0.0, %v547
    %v549 = vpop.f32.mrf.mxu0
    %550 = vmatprep.mubr.f32.mxu0 %v298
    %551 = vmatmul.mubr.f32.gmra.mxu0 %v296
    %v552 = vpop.f32.mrf.mxu0
    %v553 = vadd.f32 0.0, %v552
    %v554 = vpop.f32.mrf.mxu0
    %555 = vmatprep.mubr.f32.mxu0 %v302
    %556 = vmatmul.mubr.f32.gmra.mxu0 %v300
    %v557 = vpop.f32.mrf.mxu0
    %v558 = vadd.f32 0.0, %v557
    %v559 = vpop.f32.mrf.mxu0
    %560 = vmatprep.mubr.f32.mxu0 %v308
    %561 = vmatmul.mubr.f32.gmra.mxu0 %v306
    %v562 = vpop.f32.mrf.mxu0
    %v563 = vadd.f32 0.0, %v562
    %v564 = vpop.f32.mrf.mxu0
    %565 = vmatprep.mubr.f32.mxu0 %v312
    %566 = vmatmul.mubr.f32.gmra.mxu0 %v310
    %v567 = vpop.f32.mrf.mxu0
    %v568 = vadd.f32 0.0, %v567
    %v569 = vpop.f32.mrf.mxu0
    %570 = vmatprep.mubr.f32.mxu0 %v318
    %571 = vmatmul.mubr.f32.gmra.mxu0 %v316
    %v572 = vpop.f32.mrf.mxu0
    %v573 = vadd.f32 0.0, %v572
    %v574 = vpop.f32.mrf.mxu0
    %575 = vmatprep.mubr.f32.mxu0 %v322
    %576 = vmatmul.mubr.f32.gmra.mxu0 %v320
    %v577 = vpop.f32.mrf.mxu0
    %v578 = vadd.f32 0.0, %v577
    %v579 = vpop.f32.mrf.mxu0
    %580 = vdwg.mxu0
    %vm581 = vcmask 31744
    %582 = vst.msk [vmem:[%s5] sm:$0xff] %vm581, %v423
    %583 = vst.msk [vmem:[%s5 + $0x8] sm:$0xff] %vm581, %v428
    %584 = vst.msk [vmem:[%s5 + $0x10] sm:$0xff] %vm581, %v433
    %585 = vst.msk [vmem:[%s5 + $0x18] sm:$0xff] %vm581, %v438
    %586 = vst.msk [vmem:[%s5 + $0x20] sm:$0xff] %vm581, %v443
    %587 = vst.msk [vmem:[%s5 + $0x28] sm:$0xff] %vm581, %v448
    %588 = vst.msk [vmem:[%s5 + $0x30] sm:$0xff] %vm581, %v453
    %589 = vst.msk [vmem:[%s5 + $0x38] sm:$0xff] %vm581, %v458
    %590 = vst.msk [vmem:[%s5 + $0x40] sm:$0xff] %vm581, %v463
    %591 = vst.msk [vmem:[%s5 + $0x48] sm:$0xff] %vm581, %v468
    %592 = vst.msk [vmem:[%s5 + $0x50] sm:$0xff] %vm581, %v473
    %593 = vst.msk [vmem:[%s5 + $0x58] sm:$0xff] %vm581, %v478
    %594 = vst.msk [vmem:[%s5 + $0x60] sm:$0xff] %vm581, %v483
    %595 = vst.msk [vmem:[%s5 + $0x68] sm:$0xff] %vm581, %v488
    %596 = vst.msk [vmem:[%s5 + $0x70] sm:$0xff] %vm581, %v493
    %597 = vst.msk [vmem:[%s5 + $0x78] sm:$0xff] %vm581, %v498
    %598 = vst.msk [vmem:[%s5 + $0x80] sm:$0xff] %vm581, %v503
    %599 = vst.msk [vmem:[%s5 + $0x88] sm:$0xff] %vm581, %v508
    %600 = vst.msk [vmem:[%s5 + $0x90] sm:$0xff] %vm581, %v513
    %601 = vst.msk [vmem:[%s5 + $0x98] sm:$0xff] %vm581, %v518
    %602 = vst.msk [vmem:[%s5 + $0xa0] sm:$0xff] %vm581, %v523
    %603 = vst.msk [vmem:[%s5 + $0xa8] sm:$0xff] %vm581, %v528
    %604 = vst.msk [vmem:[%s5 + $0xb0] sm:$0xff] %vm581, %v533
    %605 = vst.msk [vmem:[%s5 + $0xb8] sm:$0xff] %vm581, %v538
    %606 = vst.msk [vmem:[%s5 + $0xc0] sm:$0xff] %vm581, %v543
    %607 = vst.msk [vmem:[%s5 + $0xc8] sm:$0xff] %vm581, %v548
    %608 = vst.msk [vmem:[%s5 + $0xd0] sm:$0xff] %vm581, %v553
    %609 = vst.msk [vmem:[%s5 + $0xd8] sm:$0xff] %vm581, %v558
    %610 = vst.msk [vmem:[%s5 + $0xe0] sm:$0xff] %vm581, %v563
    %611 = vst.msk [vmem:[%s5 + $0xe8] sm:$0xff] %vm581, %v568
    %612 = vst.msk [vmem:[%s5 + $0xf0] sm:$0xff] %vm581, %v573
    %613 = vst.msk [vmem:[%s5 + $0xf8] sm:$0xff] %vm581, %v578
    %v614 = vld [vmem:[%s3] sm:$0xff]
    %v615 = vld [vmem:[%s3 + $0x8] sm:$0xff]
    %v616 = vld [vmem:[%s3 + $0x10] sm:$0xff]
    %v617 = vld [vmem:[%s3 + $0x18] sm:$0xff]
    %v618 = vld [vmem:[%s3 + $0x20] sm:$0xff]
    %v619 = vld [vmem:[%s3 + $0x28] sm:$0xff]
    %v620 = vld [vmem:[%s3 + $0x30] sm:$0xff]
    %v621 = vld [vmem:[%s3 + $0x38] sm:$0xff]
    %v622 = vld [vmem:[%s3 + $0x40] sm:$0xff]
    %v623 = vld [vmem:[%s3 + $0x48] sm:$0xff]
    %v624 = vld [vmem:[%s3 + $0x50] sm:$0xff]
    %v625 = vld [vmem:[%s3 + $0x58] sm:$0xff]
    %v626 = vld [vmem:[%s3 + $0x60] sm:$0xff]
    %v627 = vld [vmem:[%s3 + $0x68] sm:$0xff]
    %v628 = vld [vmem:[%s3 + $0x70] sm:$0xff]
    %v629 = vld [vmem:[%s3 + $0x78] sm:$0xff]
    %v630 = vld [vmem:[%s3 + $0x80] sm:$0xff]
    %v631 = vld [vmem:[%s3 + $0x88] sm:$0xff]
    %v632 = vld [vmem:[%s3 + $0x90] sm:$0xff]
    %v633 = vld [vmem:[%s3 + $0x98] sm:$0xff]
    %v634 = vld [vmem:[%s3 + $0xa0] sm:$0xff]
    %v635 = vld [vmem:[%s3 + $0xa8] sm:$0xff]
    %v636 = vld [vmem:[%s3 + $0xb0] sm:$0xff]
    %v637 = vld [vmem:[%s3 + $0xb8] sm:$0xff]
    %v638 = vld [vmem:[%s3 + $0xc0] sm:$0xff]
    %v639 = vld [vmem:[%s3 + $0xc8] sm:$0xff]
    %v640 = vld [vmem:[%s3 + $0xd0] sm:$0xff]
    %v641 = vld [vmem:[%s3 + $0xd8] sm:$0xff]
    %v642 = vld [vmem:[%s3 + $0xe0] sm:$0xff]
    %v643 = vld [vmem:[%s3 + $0xe8] sm:$0xff]
    %v644 = vld [vmem:[%s3 + $0xf0] sm:$0xff]
    %v645 = vld [vmem:[%s3 + $0xf8] sm:$0xff]
    %646 = vmatprep.subr.mxu0 0.0
    %647 = vmatpush1.msra.mxu0 %v629
    %648 = vmatprep.subr.mxu0 0.0
    %649 = vmatpush1.msra.mxu0 %v628
    %650 = vmatprep.subr.mxu0 0.0
    %651 = vmatpush1.msra.mxu0 %v627
    %652 = vmatprep.subr.mxu0 0.0
    %653 = vmatpush1.msra.mxu0 %v626
    %654 = vmatprep.subr.mxu0 0.0
    %655 = vmatpush1.msra.mxu0 %v625
    %656 = vmatprep.subr.mxu0 0.0
    %657 = vmatpush1.msra.mxu0 %v624
    %658 = vmatprep.subr.mxu0 0.0
    %659 = vmatpush1.msra.mxu0 %v623
    %660 = vmatprep.subr.mxu0 0.0
    %661 = vmatpush1.msra.mxu0 %v622
    %662 = vmatprep.subr.mxu0 0.0
    %663 = vmatpush1.msra.mxu0 %v621
    %664 = vmatprep.subr.mxu0 0.0
    %665 = vmatpush1.msra.mxu0 %v620
    %666 = vmatprep.subr.mxu0 0.0
    %667 = vmatpush1.msra.mxu0 %v619
    %668 = vmatprep.subr.mxu0 0.0
    %669 = vmatpush1.msra.mxu0 %v618
    %670 = vmatprep.subr.mxu0 0.0
    %671 = vmatpush1.msra.mxu0 %v617
    %672 = vmatprep.subr.mxu0 0.0
    %673 = vmatpush1.msra.mxu0 %v616
    %674 = vmatprep.subr.mxu0 0.0
    %675 = vmatpush1.msra.mxu0 %v615
    %676 = vmatprep.subr.mxu0 0.0
    %677 = vmatpush1.msra.mxu0 %v614
    %678 = vmatprep.subr.mxu0 0.0
    %679 = vmatpush2.msra.mxu0 %v645
    %680 = vmatprep.subr.mxu0 0.0
    %681 = vmatpush2.msra.mxu0 %v644
    %682 = vmatprep.subr.mxu0 0.0
    %683 = vmatpush2.msra.mxu0 %v643
    %684 = vmatprep.subr.mxu0 0.0
    %685 = vmatpush2.msra.mxu0 %v642
    %686 = vmatprep.subr.mxu0 0.0
    %687 = vmatpush2.msra.mxu0 %v641
    %688 = vmatprep.subr.mxu0 0.0
    %689 = vmatpush2.msra.mxu0 %v640
    %690 = vmatprep.subr.mxu0 0.0
    %691 = vmatpush2.msra.mxu0 %v639
    %692 = vmatprep.subr.mxu0 0.0
    %693 = vmatpush2.msra.mxu0 %v638
    %694 = vmatprep.subr.mxu0 0.0
    %695 = vmatpush2.msra.mxu0 %v637
    %696 = vmatprep.subr.mxu0 0.0
    %697 = vmatpush2.msra.mxu0 %v636
    %698 = vmatprep.subr.mxu0 0.0
    %699 = vmatpush2.msra.mxu0 %v635
    %700 = vmatprep.subr.mxu0 0.0
    %701 = vmatpush2.msra.mxu0 %v634
    %702 = vmatprep.subr.mxu0 0.0
    %703 = vmatpush2.msra.mxu0 %v633
    %704 = vmatprep.subr.mxu0 0.0
    %705 = vmatpush2.msra.mxu0 %v632
    %706 = vmatprep.subr.mxu0 0.0
    %707 = vmatpush2.msra.mxu0 %v631
    %708 = vmatprep.subr.mxu0 0.0
    %709 = vmatpush2.msra.mxu0 %v630
    %710 = vmatprep.mubr.f32.mxu0 %v168
    %711 = vmatmul.mubr.f32.gmra.mxu0 %v166
    %v712 = vpop.f32.mrf.mxu0
    %v713 = vadd.f32 0.0, %v712
    %v714 = vpop.f32.mrf.mxu0
    %715 = vmatprep.mubr.f32.mxu0 %v172
    %716 = vmatmul.mubr.f32.gmra.mxu0 %v170
    %v717 = vpop.f32.mrf.mxu0
    %v718 = vadd.f32 0.0, %v717
    %v719 = vpop.f32.mrf.mxu0
    %720 = vmatprep.mubr.f32.mxu0 %v178
    %721 = vmatmul.mubr.f32.gmra.mxu0 %v176
    %v722 = vpop.f32.mrf.mxu0
    %v723 = vadd.f32 0.0, %v722
    %v724 = vpop.f32.mrf.mxu0
    %725 = vmatprep.mubr.f32.mxu0 %v182
    %726 = vmatmul.mubr.f32.gmra.mxu0 %v180
    %v727 = vpop.f32.mrf.mxu0
    %v728 = vadd.f32 0.0, %v727
    %v729 = vpop.f32.mrf.mxu0
    %730 = vmatprep.mubr.f32.mxu0 %v188
    %731 = vmatmul.mubr.f32.gmra.mxu0 %v186
    %v732 = vpop.f32.mrf.mxu0
    %v733 = vadd.f32 0.0, %v732
    %v734 = vpop.f32.mrf.mxu0
    %735 = vmatprep.mubr.f32.mxu0 %v192
    %736 = vmatmul.mubr.f32.gmra.mxu0 %v190
    %v737 = vpop.f32.mrf.mxu0
    %v738 = vadd.f32 0.0, %v737
    %v739 = vpop.f32.mrf.mxu0
    %740 = vmatprep.mubr.f32.mxu0 %v198
    %741 = vmatmul.mubr.f32.gmra.mxu0 %v196
    %v742 = vpop.f32.mrf.mxu0
    %v743 = vadd.f32 0.0, %v742
    %v744 = vpop.f32.mrf.mxu0
    %745 = vmatprep.mubr.f32.mxu0 %v202
    %746 = vmatmul.mubr.f32.gmra.mxu0 %v200
    %v747 = vpop.f32.mrf.mxu0
    %v748 = vadd.f32 0.0, %v747
    %v749 = vpop.f32.mrf.mxu0
    %750 = vmatprep.mubr.f32.mxu0 %v208
    %751 = vmatmul.mubr.f32.gmra.mxu0 %v206
    %v752 = vpop.f32.mrf.mxu0
    %v753 = vadd.f32 0.0, %v752
    %v754 = vpop.f32.mrf.mxu0
    %755 = vmatprep.mubr.f32.mxu0 %v212
    %756 = vmatmul.mubr.f32.gmra.mxu0 %v210
    %v757 = vpop.f32.mrf.mxu0
    %v758 = vadd.f32 0.0, %v757
    %v759 = vpop.f32.mrf.mxu0
    %760 = vmatprep.mubr.f32.mxu0 %v218
    %761 = vmatmul.mubr.f32.gmra.mxu0 %v216
    %v762 = vpop.f32.mrf.mxu0
    %v763 = vadd.f32 0.0, %v762
    %v764 = vpop.f32.mrf.mxu0
    %765 = vmatprep.mubr.f32.mxu0 %v222
    %766 = vmatmul.mubr.f32.gmra.mxu0 %v220
    %v767 = vpop.f32.mrf.mxu0
    %v768 = vadd.f32 0.0, %v767
    %v769 = vpop.f32.mrf.mxu0
    %770 = vmatprep.mubr.f32.mxu0 %v228
    %771 = vmatmul.mubr.f32.gmra.mxu0 %v226
    %v772 = vpop.f32.mrf.mxu0
    %v773 = vadd.f32 0.0, %v772
    %v774 = vpop.f32.mrf.mxu0
    %775 = vmatprep.mubr.f32.mxu0 %v232
    %776 = vmatmul.mubr.f32.gmra.mxu0 %v230
    %v777 = vpop.f32.mrf.mxu0
    %v778 = vadd.f32 0.0, %v777
    %v779 = vpop.f32.mrf.mxu0
    %780 = vmatprep.mubr.f32.mxu0 %v238
    %781 = vmatmul.mubr.f32.gmra.mxu0 %v236
    %v782 = vpop.f32.mrf.mxu0
    %v783 = vadd.f32 0.0, %v782
    %v784 = vpop.f32.mrf.mxu0
    %785 = vmatprep.mubr.f32.mxu0 %v242
    %786 = vmatmul.mubr.f32.gmra.mxu0 %v240
    %v787 = vpop.f32.mrf.mxu0
    %v788 = vadd.f32 0.0, %v787
    %v789 = vpop.f32.mrf.mxu0
    %790 = vmatprep.mubr.f32.mxu0 %v248
    %791 = vmatmul.mubr.f32.gmra.mxu0 %v246
    %v792 = vpop.f32.mrf.mxu0
    %v793 = vadd.f32 0.0, %v792
    %v794 = vpop.f32.mrf.mxu0
    %795 = vmatprep.mubr.f32.mxu0 %v252
    %796 = vmatmul.mubr.f32.gmra.mxu0 %v250
    %v797 = vpop.f32.mrf.mxu0
    %v798 = vadd.f32 0.0, %v797
    %v799 = vpop.f32.mrf.mxu0
    %800 = vmatprep.mubr.f32.mxu0 %v258
    %801 = vmatmul.mubr.f32.gmra.mxu0 %v256
    %v802 = vpop.f32.mrf.mxu0
    %v803 = vadd.f32 0.0, %v802
    %v804 = vpop.f32.mrf.mxu0
    %805 = vmatprep.mubr.f32.mxu0 %v262
    %806 = vmatmul.mubr.f32.gmra.mxu0 %v260
    %v807 = vpop.f32.mrf.mxu0
    %v808 = vadd.f32 0.0, %v807
    %v809 = vpop.f32.mrf.mxu0
    %810 = vmatprep.mubr.f32.mxu0 %v268
    %811 = vmatmul.mubr.f32.gmra.mxu0 %v266
    %v812 = vpop.f32.mrf.mxu0
    %v813 = vadd.f32 0.0, %v812
    %v814 = vpop.f32.mrf.mxu0
    %815 = vmatprep.mubr.f32.mxu0 %v272
    %816 = vmatmul.mubr.f32.gmra.mxu0 %v270
    %v817 = vpop.f32.mrf.mxu0
    %v818 = vadd.f32 0.0, %v817
    %v819 = vpop.f32.mrf.mxu0
    %820 = vmatprep.mubr.f32.mxu0 %v278
    %821 = vmatmul.mubr.f32.gmra.mxu0 %v276
    %v822 = vpop.f32.mrf.mxu0
    %v823 = vadd.f32 0.0, %v822
    %v824 = vpop.f32.mrf.mxu0
    %825 = vmatprep.mubr.f32.mxu0 %v282
    %826 = vmatmul.mubr.f32.gmra.mxu0 %v280
    %v827 = vpop.f32.mrf.mxu0
    %v828 = vadd.f32 0.0, %v827
    %v829 = vpop.f32.mrf.mxu0
    %830 = vmatprep.mubr.f32.mxu0 %v288
    %831 = vmatmul.mubr.f32.gmra.mxu0 %v286
    %v832 = vpop.f32.mrf.mxu0
    %v833 = vadd.f32 0.0, %v832
    %v834 = vpop.f32.mrf.mxu0
    %835 = vmatprep.mubr.f32.mxu0 %v292
    %836 = vmatmul.mubr.f32.gmra.mxu0 %v290
    %v837 = vpop.f32.mrf.mxu0
    %v838 = vadd.f32 0.0, %v837
    %v839 = vpop.f32.mrf.mxu0
    %840 = vmatprep.mubr.f32.mxu0 %v298
    %841 = vmatmul.mubr.f32.gmra.mxu0 %v296
    %v842 = vpop.f32.mrf.mxu0
    %v843 = vadd.f32 0.0, %v842
    %v844 = vpop.f32.mrf.mxu0
    %845 = vmatprep.mubr.f32.mxu0 %v302
    %846 = vmatmul.mubr.f32.gmra.mxu0 %v300
    %v847 = vpop.f32.mrf.mxu0
    %v848 = vadd.f32 0.0, %v847
    %v849 = vpop.f32.mrf.mxu0
    %850 = vmatprep.mubr.f32.mxu0 %v308
    %851 = vmatmul.mubr.f32.gmra.mxu0 %v306
    %v852 = vpop.f32.mrf.mxu0
    %v853 = vadd.f32 0.0, %v852
    %v854 = vpop.f32.mrf.mxu0
    %855 = vmatprep.mubr.f32.mxu0 %v312
    %856 = vmatmul.mubr.f32.gmra.mxu0 %v310
    %v857 = vpop.f32.mrf.mxu0
    %v858 = vadd.f32 0.0, %v857
    %v859 = vpop.f32.mrf.mxu0
    %860 = vmatprep.mubr.f32.mxu0 %v318
    %861 = vmatmul.mubr.f32.gmra.mxu0 %v316
    %v862 = vpop.f32.mrf.mxu0
    %v863 = vadd.f32 0.0, %v862
    %v864 = vpop.f32.mrf.mxu0
    %865 = vmatprep.mubr.f32.mxu0 %v322
    %866 = vmatmul.mubr.f32.gmra.mxu0 %v320
    %v867 = vpop.f32.mrf.mxu0
    %v868 = vadd.f32 0.0, %v867
    %v869 = vpop.f32.mrf.mxu0
    %870 = vdwg.mxu0
    %871 = vxpose.xlu0.b32.start [1/16] %v713, 128
    %872 = vxpose.xlu0.b32.cont [2/16] %v718, 128
    %873 = vxpose.xlu0.b32.cont [3/16] %v723, 128
    %874 = vxpose.xlu0.b32.cont [4/16] %v728, 128
    %875 = vxpose.xlu0.b32.cont [5/16] %v733, 128
    %876 = vxpose.xlu0.b32.cont [6/16] %v738, 128
    %877 = vxpose.xlu0.b32.cont [7/16] %v743, 128
    %878 = vxpose.xlu0.b32.cont [8/16] %v748, 128
    %879 = vxpose.xlu0.b32.cont [9/16] %v753, 128
    %880 = vxpose.xlu0.b32.cont [10/16] %v758, 128
    %881 = vxpose.xlu0.b32.cont [11/16] %v763, 128
    %882 = vxpose.xlu0.b32.cont [12/16] %v768, 128
    %883 = vxpose.xlu0.b32.cont [13/16] %v773, 128
    %884 = vxpose.xlu0.b32.cont [14/16] %v778, 128
    %885 = vxpose.xlu0.b32.cont [15/16] %v783, 128
    %886 = vxpose.xlu0.b32.end [16/16] %v788, 128
    %v887 = vpop.trf.xlu0
    %v888 = vpop.trf.xlu0
    %v889 = vpop.trf.xlu0
    %v890 = vpop.trf.xlu0
    %v891 = vpop.trf.xlu0
    %v892 = vpop.trf.xlu0
    %v893 = vpop.trf.xlu0
    %v894 = vpop.trf.xlu0
    %v895 = vpop.trf.xlu0
    %v896 = vpop.trf.xlu0
    %v897 = vpop.trf.xlu0
    %v898 = vpop.trf.xlu0
    %v899 = vpop.trf.xlu0
    %v900 = vpop.trf.xlu0
    %v901 = vpop.trf.xlu0
    %v902 = vpop.trf.xlu0
    %903 = vxpose.xlu0.b32.start [1/16] %v793, 128
    %904 = vxpose.xlu0.b32.cont [2/16] %v798, 128
    %905 = vxpose.xlu0.b32.cont [3/16] %v803, 128
    %906 = vxpose.xlu0.b32.cont [4/16] %v808, 128
    %907 = vxpose.xlu0.b32.cont [5/16] %v813, 128
    %908 = vxpose.xlu0.b32.cont [6/16] %v818, 128
    %909 = vxpose.xlu0.b32.cont [7/16] %v823, 128
    %910 = vxpose.xlu0.b32.cont [8/16] %v828, 128
    %911 = vxpose.xlu0.b32.cont [9/16] %v833, 128
    %912 = vxpose.xlu0.b32.cont [10/16] %v838, 128
    %913 = vxpose.xlu0.b32.cont [11/16] %v843, 128
    %914 = vxpose.xlu0.b32.cont [12/16] %v848, 128
    %915 = vxpose.xlu0.b32.cont [13/16] %v853, 128
    %916 = vxpose.xlu0.b32.cont [14/16] %v858, 128
    %917 = vxpose.xlu0.b32.cont [15/16] %v863, 128
    %918 = vxpose.xlu0.b32.end [16/16] %v868, 128
    %v919 = vpop.trf.xlu0
    %v920 = vpop.trf.xlu0
    %v921 = vpop.trf.xlu0
    %v922 = vpop.trf.xlu0
    %v923 = vpop.trf.xlu0
    %v924 = vpop.trf.xlu0
    %v925 = vpop.trf.xlu0
    %v926 = vpop.trf.xlu0
    %v927 = vpop.trf.xlu0
    %v928 = vpop.trf.xlu0
    %v929 = vpop.trf.xlu0
    %v930 = vpop.trf.xlu0
    %v931 = vpop.trf.xlu0
    %v932 = vpop.trf.xlu0
    %v933 = vpop.trf.xlu0
    %v934 = vpop.trf.xlu0
    %v937 = vcombine.low %v887, %v919
    %939 = vst [vmem:[#allocation2] sm:$0xff] %v937
    %v940 = vpack.c.bf16 %v170, %v166
    %v941 = vpack.c.bf16 %v180, %v176
    %v942 = vpack.c.bf16 %v190, %v186
    %v943 = vpack.c.bf16 %v200, %v196
    %v944 = vpack.c.bf16 %v210, %v206
    %v945 = vpack.c.bf16 %v220, %v216
    %v946 = vpack.c.bf16 %v230, %v226
    %v947 = vpack.c.bf16 %v240, %v236
    %v948 = vpack.c.bf16 %v250, %v246
    %v949 = vpack.c.bf16 %v260, %v256
    %v950 = vpack.c.bf16 %v270, %v266
    %v951 = vpack.c.bf16 %v280, %v276
    %v952 = vpack.c.bf16 %v290, %v286
    %v953 = vpack.c.bf16 %v300, %v296
    %v954 = vpack.c.bf16 %v310, %v306
    %v955 = vpack.c.bf16 %v320, %v316
    %v972 = vunpack.c.l.b16 %v940
    %v973 = vunpack.c.h.b16 %v940
    %v974 = vunpack.c.l.b16 %v941
    %v975 = vunpack.c.h.b16 %v941
    %v976 = vunpack.c.l.b16 %v942
    %v977 = vunpack.c.h.b16 %v942
    %v978 = vunpack.c.l.b16 %v943
    %v979 = vunpack.c.h.b16 %v943
    %v980 = vunpack.c.l.b16 %v944
    %v981 = vunpack.c.h.b16 %v944
    %v982 = vunpack.c.l.b16 %v945
    %v983 = vunpack.c.h.b16 %v945
    %v984 = vunpack.c.l.b16 %v946
    %v985 = vunpack.c.h.b16 %v946
    %v986 = vunpack.c.l.b16 %v947
    %v987 = vunpack.c.h.b16 %v947
    %v988 = vunpack.c.l.b16 %v948
    %v989 = vunpack.c.h.b16 %v948
    %v990 = vunpack.c.l.b16 %v949
    %v991 = vunpack.c.h.b16 %v949
    %v992 = vunpack.c.l.b16 %v950
    %v993 = vunpack.c.h.b16 %v950
    %v994 = vunpack.c.l.b16 %v951
    %v995 = vunpack.c.h.b16 %v951
    %v996 = vunpack.c.l.b16 %v952
    %v997 = vunpack.c.h.b16 %v952
    %v998 = vunpack.c.l.b16 %v953
    %v999 = vunpack.c.h.b16 %v953
    %v1000 = vunpack.c.l.b16 %v954
    %v1001 = vunpack.c.h.b16 %v954
    %v1002 = vunpack.c.l.b16 %v955
    %v1003 = vunpack.c.h.b16 %v955
    %v1004 = vpack.c.b16 %v972, %v972
    %v1005 = vpack.c.b16 %v973, %v973
    %v1006 = vpack.c.b16 %v974, %v974
    %v1007 = vpack.c.b16 %v975, %v975
    %v1008 = vpack.c.b16 %v976, %v976
    %v1009 = vpack.c.b16 %v977, %v977
    %v1010 = vpack.c.b16 %v978, %v978
    %v1011 = vpack.c.b16 %v979, %v979
    %v1012 = vpack.c.b16 %v980, %v980
    %v1013 = vpack.c.b16 %v981, %v981
    %v1014 = vpack.c.b16 %v982, %v982
    %v1015 = vpack.c.b16 %v983, %v983
    %v1016 = vpack.c.b16 %v984, %v984
    %v1017 = vpack.c.b16 %v985, %v985
    %v1018 = vpack.c.b16 %v986, %v986
    %v1019 = vpack.c.b16 %v987, %v987
    %v1020 = vpack.c.b16 %v988, %v988
    %v1021 = vpack.c.b16 %v989, %v989
    %v1022 = vpack.c.b16 %v990, %v990
    %v1023 = vpack.c.b16 %v991, %v991
    %v1024 = vpack.c.b16 %v992, %v992
    %v1025 = vpack.c.b16 %v993, %v993
    %v1026 = vpack.c.b16 %v994, %v994
    %v1027 = vpack.c.b16 %v995, %v995
    %v1028 = vpack.c.b16 %v996, %v996
    %v1029 = vpack.c.b16 %v997, %v997
    %v1030 = vpack.c.b16 %v998, %v998
    %v1031 = vpack.c.b16 %v999, %v999
    %v1032 = vpack.c.b16 %v1000, %v1000
    %v1033 = vpack.c.b16 %v1001, %v1001
    %v1034 = vpack.c.b16 %v1002, %v1002
    %v1035 = vpack.c.b16 %v1003, %v1003
    %vm1068 = vcmask 519168
    %1069 = vst.msk [vmem:[%s4] sm:$0xf] %vm1068, %v1004
    %1070 = vst.msk [vmem:[%s4 + $0x4] sm:$0xf] %vm1068, %v1005
    %1071 = vst.msk [vmem:[%s4 + $0x8] sm:$0xf] %vm1068, %v1006
    %1072 = vst.msk [vmem:[%s4 + $0xc] sm:$0xf] %vm1068, %v1007
    %1073 = vst.msk [vmem:[%s4 + $0x10] sm:$0xf] %vm1068, %v1008
    %1074 = vst.msk [vmem:[%s4 + $0x14] sm:$0xf] %vm1068, %v1009
    %1075 = vst.msk [vmem:[%s4 + $0x18] sm:$0xf] %vm1068, %v1010
    %1076 = vst.msk [vmem:[%s4 + $0x1c] sm:$0xf] %vm1068, %v1011
    %1077 = vst.msk [vmem:[%s4 + $0x20] sm:$0xf] %vm1068, %v1012
    %1078 = vst.msk [vmem:[%s4 + $0x24] sm:$0xf] %vm1068, %v1013
    %1079 = vst.msk [vmem:[%s4 + $0x28] sm:$0xf] %vm1068, %v1014
    %1080 = vst.msk [vmem:[%s4 + $0x2c] sm:$0xf] %vm1068, %v1015
    %1081 = vst.msk [vmem:[%s4 + $0x30] sm:$0xf] %vm1068, %v1016
    %1082 = vst.msk [vmem:[%s4 + $0x34] sm:$0xf] %vm1068, %v1017
    %1083 = vst.msk [vmem:[%s4 + $0x38] sm:$0xf] %vm1068, %v1018
    %1084 = vst.msk [vmem:[%s4 + $0x3c] sm:$0xf] %vm1068, %v1019
    %1085 = vst.msk [vmem:[%s4 + $0x40] sm:$0xf] %vm1068, %v1020
    %1086 = vst.msk [vmem:[%s4 + $0x44] sm:$0xf] %vm1068, %v1021
    %1087 = vst.msk [vmem:[%s4 + $0x48] sm:$0xf] %vm1068, %v1022
    %1088 = vst.msk [vmem:[%s4 + $0x4c] sm:$0xf] %vm1068, %v1023
    %1089 = vst.msk [vmem:[%s4 + $0x50] sm:$0xf] %vm1068, %v1024
    %1090 = vst.msk [vmem:[%s4 + $0x54] sm:$0xf] %vm1068, %v1025
    %1091 = vst.msk [vmem:[%s4 + $0x58] sm:$0xf] %vm1068, %v1026
    %1092 = vst.msk [vmem:[%s4 + $0x5c] sm:$0xf] %vm1068, %v1027
    %1093 = vst.msk [vmem:[%s4 + $0x60] sm:$0xf] %vm1068, %v1028
    %1094 = vst.msk [vmem:[%s4 + $0x64] sm:$0xf] %vm1068, %v1029
    %1095 = vst.msk [vmem:[%s4 + $0x68] sm:$0xf] %vm1068, %v1030
    %1096 = vst.msk [vmem:[%s4 + $0x6c] sm:$0xf] %vm1068, %v1031
    %1097 = vst.msk [vmem:[%s4 + $0x70] sm:$0xf] %vm1068, %v1032
    %1098 = vst.msk [vmem:[%s4 + $0x74] sm:$0xf] %vm1068, %v1033
    %1099 = vst.msk [vmem:[%s4 + $0x78] sm:$0xf] %vm1068, %v1034
    %1100 = vst.msk [vmem:[%s4 + $0x7c] sm:$0xf] %vm1068, %v1035
    %1101 = vrot.lane.b32.xlu0 %v1004, 64
    %v1102 = vpop.permute.xlu0 %1101
    %1103 = vrot.lane.b32.xlu0 %v1005, 64
    %v1104 = vpop.permute.xlu0 %1103
    %1105 = vrot.lane.b32.xlu0 %v1006, 64
    %v1106 = vpop.permute.xlu0 %1105
    %1107 = vrot.lane.b32.xlu0 %v1007, 64
    %v1108 = vpop.permute.xlu0 %1107
    %1109 = vrot.lane.b32.xlu0 %v1008, 64
    %v1110 = vpop.permute.xlu0 %1109
    %1111 = vrot.lane.b32.xlu0 %v1009, 64
    %v1112 = vpop.permute.xlu0 %1111
    %1113 = vrot.lane.b32.xlu0 %v1010, 64
    %v1114 = vpop.permute.xlu0 %1113
    %1115 = vrot.lane.b32.xlu0 %v1011, 64
    %v1116 = vpop.permute.xlu0 %1115
    %1117 = vrot.lane.b32.xlu0 %v1012, 64
    %v1118 = vpop.permute.xlu0 %1117
    %1119 = vrot.lane.b32.xlu0 %v1013, 64
    %v1120 = vpop.permute.xlu0 %1119
    %1121 = vrot.lane.b32.xlu0 %v1014, 64
    %v1122 = vpop.permute.xlu0 %1121
    %1123 = vrot.lane.b32.xlu0 %v1015, 64
    %v1124 = vpop.permute.xlu0 %1123
    %1125 = vrot.lane.b32.xlu0 %v1016, 64
    %v1126 = vpop.permute.xlu0 %1125
    %1127 = vrot.lane.b32.xlu0 %v1017, 64
    %v1128 = vpop.permute.xlu0 %1127
    %1129 = vrot.lane.b32.xlu0 %v1018, 64
    %v1130 = vpop.permute.xlu0 %1129
    %1131 = vrot.lane.b32.xlu0 %v1019, 64
    %v1132 = vpop.permute.xlu0 %1131
    %1133 = vrot.lane.b32.xlu0 %v1020, 64
    %v1134 = vpop.permute.xlu0 %1133
    %1135 = vrot.lane.b32.xlu0 %v1021, 64
    %v1136 = vpop.permute.xlu0 %1135
    %1137 = vrot.lane.b32.xlu0 %v1022, 64
    %v1138 = vpop.permute.xlu0 %1137
    %1139 = vrot.lane.b32.xlu0 %v1023, 64
    %v1140 = vpop.permute.xlu0 %1139
    %1141 = vrot.lane.b32.xlu0 %v1024, 64
    %v1142 = vpop.permute.xlu0 %1141
    %1143 = vrot.lane.b32.xlu0 %v1025, 64
    %v1144 = vpop.permute.xlu0 %1143
    %1145 = vrot.lane.b32.xlu0 %v1026, 64
    %v1146 = vpop.permute.xlu0 %1145
    %1147 = vrot.lane.b32.xlu0 %v1027, 64
    %v1148 = vpop.permute.xlu0 %1147
    %1149 = vrot.lane.b32.xlu0 %v1028, 64
    %v1150 = vpop.permute.xlu0 %1149
    %1151 = vrot.lane.b32.xlu0 %v1029, 64
    %v1152 = vpop.permute.xlu0 %1151
    %1153 = vrot.lane.b32.xlu0 %v1030, 64
    %v1154 = vpop.permute.xlu0 %1153
    %1155 = vrot.lane.b32.xlu0 %v1031, 64
    %v1156 = vpop.permute.xlu0 %1155
    %1157 = vrot.lane.b32.xlu0 %v1032, 64
    %v1158 = vpop.permute.xlu0 %1157
    %1159 = vrot.lane.b32.xlu0 %v1033, 64
    %v1160 = vpop.permute.xlu0 %1159
    %1161 = vrot.lane.b32.xlu0 %v1034, 64
    %v1162 = vpop.permute.xlu0 %1161
    %1163 = vrot.lane.b32.xlu0 %v1035, 64
    %v1164 = vpop.permute.xlu0 %1163
    %s1197 = scalar_lea.vmem %s4, 128
    %1198 = vst.msk [vmem:[%s1197] sm:$0xf] %vm1068, %v1102
    %1199 = vst.msk [vmem:[%s1197 + $0x4] sm:$0xf] %vm1068, %v1104
    %1200 = vst.msk [vmem:[%s1197 + $0x8] sm:$0xf] %vm1068, %v1106
    %1201 = vst.msk [vmem:[%s1197 + $0xc] sm:$0xf] %vm1068, %v1108
    %1202 = vst.msk [vmem:[%s1197 + $0x10] sm:$0xf] %vm1068, %v1110
    %1203 = vst.msk [vmem:[%s1197 + $0x14] sm:$0xf] %vm1068, %v1112
    %1204 = vst.msk [vmem:[%s1197 + $0x18] sm:$0xf] %vm1068, %v1114
    %1205 = vst.msk [vmem:[%s1197 + $0x1c] sm:$0xf] %vm1068, %v1116
    %1206 = vst.msk [vmem:[%s1197 + $0x20] sm:$0xf] %vm1068, %v1118
    %1207 = vst.msk [vmem:[%s1197 + $0x24] sm:$0xf] %vm1068, %v1120
    %1208 = vst.msk [vmem:[%s1197 + $0x28] sm:$0xf] %vm1068, %v1122
    %1209 = vst.msk [vmem:[%s1197 + $0x2c] sm:$0xf] %vm1068, %v1124
    %1210 = vst.msk [vmem:[%s1197 + $0x30] sm:$0xf] %vm1068, %v1126
    %1211 = vst.msk [vmem:[%s1197 + $0x34] sm:$0xf] %vm1068, %v1128
    %1212 = vst.msk [vmem:[%s1197 + $0x38] sm:$0xf] %vm1068, %v1130
    %1213 = vst.msk [vmem:[%s1197 + $0x3c] sm:$0xf] %vm1068, %v1132
    %1214 = vst.msk [vmem:[%s1197 + $0x40] sm:$0xf] %vm1068, %v1134
    %1215 = vst.msk [vmem:[%s1197 + $0x44] sm:$0xf] %vm1068, %v1136
    %1216 = vst.msk [vmem:[%s1197 + $0x48] sm:$0xf] %vm1068, %v1138
    %1217 = vst.msk [vmem:[%s1197 + $0x4c] sm:$0xf] %vm1068, %v1140
    %1218 = vst.msk [vmem:[%s1197 + $0x50] sm:$0xf] %vm1068, %v1142
    %1219 = vst.msk [vmem:[%s1197 + $0x54] sm:$0xf] %vm1068, %v1144
    %1220 = vst.msk [vmem:[%s1197 + $0x58] sm:$0xf] %vm1068, %v1146
    %1221 = vst.msk [vmem:[%s1197 + $0x5c] sm:$0xf] %vm1068, %v1148
    %1222 = vst.msk [vmem:[%s1197 + $0x60] sm:$0xf] %vm1068, %v1150
    %1223 = vst.msk [vmem:[%s1197 + $0x64] sm:$0xf] %vm1068, %v1152
    %1224 = vst.msk [vmem:[%s1197 + $0x68] sm:$0xf] %vm1068, %v1154
    %1225 = vst.msk [vmem:[%s1197 + $0x6c] sm:$0xf] %vm1068, %v1156
    %1226 = vst.msk [vmem:[%s1197 + $0x70] sm:$0xf] %vm1068, %v1158
    %1227 = vst.msk [vmem:[%s1197 + $0x74] sm:$0xf] %vm1068, %v1160
    %1228 = vst.msk [vmem:[%s1197 + $0x78] sm:$0xf] %vm1068, %v1162
    %1229 = vst.msk [vmem:[%s1197 + $0x7c] sm:$0xf] %vm1068, %v1164
    %v1230 = vpack.c.bf16 %v172, %v168
    %v1231 = vpack.c.bf16 %v182, %v178
    %v1232 = vpack.c.bf16 %v192, %v188
    %v1233 = vpack.c.bf16 %v202, %v198
    %v1234 = vpack.c.bf16 %v212, %v208
    %v1235 = vpack.c.bf16 %v222, %v218
    %v1236 = vpack.c.bf16 %v232, %v228
    %v1237 = vpack.c.bf16 %v242, %v238
    %v1238 = vpack.c.bf16 %v252, %v248
    %v1239 = vpack.c.bf16 %v262, %v258
    %v1240 = vpack.c.bf16 %v272, %v268
    %v1241 = vpack.c.bf16 %v282, %v278
    %v1242 = vpack.c.bf16 %v292, %v288
    %v1243 = vpack.c.bf16 %v302, %v298
    %v1244 = vpack.c.bf16 %v312, %v308
    %v1245 = vpack.c.bf16 %v322, %v318
    %v1262 = vunpack.c.l.b16 %v1230
    %v1263 = vunpack.c.h.b16 %v1230
    %v1264 = vunpack.c.l.b16 %v1231
    %v1265 = vunpack.c.h.b16 %v1231
    %v1266 = vunpack.c.l.b16 %v1232
    %v1267 = vunpack.c.h.b16 %v1232
    %v1268 = vunpack.c.l.b16 %v1233
    %v1269 = vunpack.c.h.b16 %v1233
    %v1270 = vunpack.c.l.b16 %v1234
    %v1271 = vunpack.c.h.b16 %v1234
    %v1272 = vunpack.c.l.b16 %v1235
    %v1273 = vunpack.c.h.b16 %v1235
    %v1274 = vunpack.c.l.b16 %v1236
    %v1275 = vunpack.c.h.b16 %v1236
    %v1276 = vunpack.c.l.b16 %v1237
    %v1277 = vunpack.c.h.b16 %v1237
    %v1278 = vunpack.c.l.b16 %v1238
    %v1279 = vunpack.c.h.b16 %v1238
    %v1280 = vunpack.c.l.b16 %v1239
    %v1281 = vunpack.c.h.b16 %v1239
    %v1282 = vunpack.c.l.b16 %v1240
    %v1283 = vunpack.c.h.b16 %v1240
    %v1284 = vunpack.c.l.b16 %v1241
    %v1285 = vunpack.c.h.b16 %v1241
    %v1286 = vunpack.c.l.b16 %v1242
    %v1287 = vunpack.c.h.b16 %v1242
    %v1288 = vunpack.c.l.b16 %v1243
    %v1289 = vunpack.c.h.b16 %v1243
    %v1290 = vunpack.c.l.b16 %v1244
    %v1291 = vunpack.c.h.b16 %v1244
    %v1292 = vunpack.c.l.b16 %v1245
    %v1293 = vunpack.c.h.b16 %v1245
    %v1294 = vpack.c.b16 %v1262, %v1262
    %v1295 = vpack.c.b16 %v1263, %v1263
    %v1296 = vpack.c.b16 %v1264, %v1264
    %v1297 = vpack.c.b16 %v1265, %v1265
    %v1298 = vpack.c.b16 %v1266, %v1266
    %v1299 = vpack.c.b16 %v1267, %v1267
    %v1300 = vpack.c.b16 %v1268, %v1268
    %v1301 = vpack.c.b16 %v1269, %v1269
    %v1302 = vpack.c.b16 %v1270, %v1270
    %v1303 = vpack.c.b16 %v1271, %v1271
    %v1304 = vpack.c.b16 %v1272, %v1272
    %v1305 = vpack.c.b16 %v1273, %v1273
    %v1306 = vpack.c.b16 %v1274, %v1274
    %v1307 = vpack.c.b16 %v1275, %v1275
    %v1308 = vpack.c.b16 %v1276, %v1276
    %v1309 = vpack.c.b16 %v1277, %v1277
    %v1310 = vpack.c.b16 %v1278, %v1278
    %v1311 = vpack.c.b16 %v1279, %v1279
    %v1312 = vpack.c.b16 %v1280, %v1280
    %v1313 = vpack.c.b16 %v1281, %v1281
    %v1314 = vpack.c.b16 %v1282, %v1282
    %v1315 = vpack.c.b16 %v1283, %v1283
    %v1316 = vpack.c.b16 %v1284, %v1284
    %v1317 = vpack.c.b16 %v1285, %v1285
    %v1318 = vpack.c.b16 %v1286, %v1286
    %v1319 = vpack.c.b16 %v1287, %v1287
    %v1320 = vpack.c.b16 %v1288, %v1288
    %v1321 = vpack.c.b16 %v1289, %v1289
    %v1322 = vpack.c.b16 %v1290, %v1290
    %v1323 = vpack.c.b16 %v1291, %v1291
    %v1324 = vpack.c.b16 %v1292, %v1292
    %v1325 = vpack.c.b16 %v1293, %v1293
    %s1358 = scalar_lea.vmem %s4, 256
    %1359 = vst.msk [vmem:[%s1358] sm:$0xf] %vm1068, %v1294
    %1360 = vst.msk [vmem:[%s1358 + $0x4] sm:$0xf] %vm1068, %v1295
    %1361 = vst.msk [vmem:[%s1358 + $0x8] sm:$0xf] %vm1068, %v1296
    %1362 = vst.msk [vmem:[%s1358 + $0xc] sm:$0xf] %vm1068, %v1297
    %1363 = vst.msk [vmem:[%s1358 + $0x10] sm:$0xf] %vm1068, %v1298
    %1364 = vst.msk [vmem:[%s1358 + $0x14] sm:$0xf] %vm1068, %v1299
    %1365 = vst.msk [vmem:[%s1358 + $0x18] sm:$0xf] %vm1068, %v1300
    %1366 = vst.msk [vmem:[%s1358 + $0x1c] sm:$0xf] %vm1068, %v1301
    %1367 = vst.msk [vmem:[%s1358 + $0x20] sm:$0xf] %vm1068, %v1302
    %1368 = vst.msk [vmem:[%s1358 + $0x24] sm:$0xf] %vm1068, %v1303
    %1369 = vst.msk [vmem:[%s1358 + $0x28] sm:$0xf] %vm1068, %v1304
    %1370 = vst.msk [vmem:[%s1358 + $0x2c] sm:$0xf] %vm1068, %v1305
    %1371 = vst.msk [vmem:[%s1358 + $0x30] sm:$0xf] %vm1068, %v1306
    %1372 = vst.msk [vmem:[%s1358 + $0x34] sm:$0xf] %vm1068, %v1307
    %1373 = vst.msk [vmem:[%s1358 + $0x38] sm:$0xf] %vm1068, %v1308
    %1374 = vst.msk [vmem:[%s1358 + $0x3c] sm:$0xf] %vm1068, %v1309
    %1375 = vst.msk [vmem:[%s1358 + $0x40] sm:$0xf] %vm1068, %v1310
    %1376 = vst.msk [vmem:[%s1358 + $0x44] sm:$0xf] %vm1068, %v1311
    %1377 = vst.msk [vmem:[%s1358 + $0x48] sm:$0xf] %vm1068, %v1312
    %1378 = vst.msk [vmem:[%s1358 + $0x4c] sm:$0xf] %vm1068, %v1313
    %1379 = vst.msk [vmem:[%s1358 + $0x50] sm:$0xf] %vm1068, %v1314
    %1380 = vst.msk [vmem:[%s1358 + $0x54] sm:$0xf] %vm1068, %v1315
    %1381 = vst.msk [vmem:[%s1358 + $0x58] sm:$0xf] %vm1068, %v1316
    %1382 = vst.msk [vmem:[%s1358 + $0x5c] sm:$0xf] %vm1068, %v1317
    %1383 = vst.msk [vmem:[%s1358 + $0x60] sm:$0xf] %vm1068, %v1318
    %1384 = vst.msk [vmem:[%s1358 + $0x64] sm:$0xf] %vm1068, %v1319
    %1385 = vst.msk [vmem:[%s1358 + $0x68] sm:$0xf] %vm1068, %v1320
    %1386 = vst.msk [vmem:[%s1358 + $0x6c] sm:$0xf] %vm1068, %v1321
    %1387 = vst.msk [vmem:[%s1358 + $0x70] sm:$0xf] %vm1068, %v1322
    %1388 = vst.msk [vmem:[%s1358 + $0x74] sm:$0xf] %vm1068, %v1323
    %1389 = vst.msk [vmem:[%s1358 + $0x78] sm:$0xf] %vm1068, %v1324
    %1390 = vst.msk [vmem:[%s1358 + $0x7c] sm:$0xf] %vm1068, %v1325
    %1391 = vrot.lane.b32.xlu0 %v1294, 64
    %v1392 = vpop.permute.xlu0 %1391
    %1393 = vrot.lane.b32.xlu0 %v1295, 64
    %v1394 = vpop.permute.xlu0 %1393
    %1395 = vrot.lane.b32.xlu0 %v1296, 64
    %v1396 = vpop.permute.xlu0 %1395
    %1397 = vrot.lane.b32.xlu0 %v1297, 64
    %v1398 = vpop.permute.xlu0 %1397
    %1399 = vrot.lane.b32.xlu0 %v1298, 64
    %v1400 = vpop.permute.xlu0 %1399
    %1401 = vrot.lane.b32.xlu0 %v1299, 64
    %v1402 = vpop.permute.xlu0 %1401
    %1403 = vrot.lane.b32.xlu0 %v1300, 64
    %v1404 = vpop.permute.xlu0 %1403
    %1405 = vrot.lane.b32.xlu0 %v1301, 64
    %v1406 = vpop.permute.xlu0 %1405
    %1407 = vrot.lane.b32.xlu0 %v1302, 64
    %v1408 = vpop.permute.xlu0 %1407
    %1409 = vrot.lane.b32.xlu0 %v1303, 64
    %v1410 = vpop.permute.xlu0 %1409
    %1411 = vrot.lane.b32.xlu0 %v1304, 64
    %v1412 = vpop.permute.xlu0 %1411
    %1413 = vrot.lane.b32.xlu0 %v1305, 64
    %v1414 = vpop.permute.xlu0 %1413
    %1415 = vrot.lane.b32.xlu0 %v1306, 64
    %v1416 = vpop.permute.xlu0 %1415
    %1417 = vrot.lane.b32.xlu0 %v1307, 64
    %v1418 = vpop.permute.xlu0 %1417
    %1419 = vrot.lane.b32.xlu0 %v1308, 64
    %v1420 = vpop.permute.xlu0 %1419
    %1421 = vrot.lane.b32.xlu0 %v1309, 64
    %v1422 = vpop.permute.xlu0 %1421
    %1423 = vrot.lane.b32.xlu0 %v1310, 64
    %v1424 = vpop.permute.xlu0 %1423
    %1425 = vrot.lane.b32.xlu0 %v1311, 64
    %v1426 = vpop.permute.xlu0 %1425
    %1427 = vrot.lane.b32.xlu0 %v1312, 64
    %v1428 = vpop.permute.xlu0 %1427
    %1429 = vrot.lane.b32.xlu0 %v1313, 64
    %v1430 = vpop.permute.xlu0 %1429
    %1431 = vrot.lane.b32.xlu0 %v1314, 64
    %v1432 = vpop.permute.xlu0 %1431
    %1433 = vrot.lane.b32.xlu0 %v1315, 64
    %v1434 = vpop.permute.xlu0 %1433
    %1435 = vrot.lane.b32.xlu0 %v1316, 64
    %v1436 = vpop.permute.xlu0 %1435
    %1437 = vrot.lane.b32.xlu0 %v1317, 64
    %v1438 = vpop.permute.xlu0 %1437
    %1439 = vrot.lane.b32.xlu0 %v1318, 64
    %v1440 = vpop.permute.xlu0 %1439
    %1441 = vrot.lane.b32.xlu0 %v1319, 64
    %v1442 = vpop.permute.xlu0 %1441
    %1443 = vrot.lane.b32.xlu0 %v1320, 64
    %v1444 = vpop.permute.xlu0 %1443
    %1445 = vrot.lane.b32.xlu0 %v1321, 64
    %v1446 = vpop.permute.xlu0 %1445
    %1447 = vrot.lane.b32.xlu0 %v1322, 64
    %v1448 = vpop.permute.xlu0 %1447
    %1449 = vrot.lane.b32.xlu0 %v1323, 64
    %v1450 = vpop.permute.xlu0 %1449
    %1451 = vrot.lane.b32.xlu0 %v1324, 64
    %v1452 = vpop.permute.xlu0 %1451
    %1453 = vrot.lane.b32.xlu0 %v1325, 64
    %v1454 = vpop.permute.xlu0 %1453
    %s1487 = scalar_lea.vmem %s4, 384
    %1488 = vst.msk [vmem:[%s1487] sm:$0xf] %vm1068, %v1392
    %1489 = vst.msk [vmem:[%s1487 + $0x4] sm:$0xf] %vm1068, %v1394
    %1490 = vst.msk [vmem:[%s1487 + $0x8] sm:$0xf] %vm1068, %v1396
    %1491 = vst.msk [vmem:[%s1487 + $0xc] sm:$0xf] %vm1068, %v1398
    %1492 = vst.msk [vmem:[%s1487 + $0x10] sm:$0xf] %vm1068, %v1400
    %1493 = vst.msk [vmem:[%s1487 + $0x14] sm:$0xf] %vm1068, %v1402
    %1494 = vst.msk [vmem:[%s1487 + $0x18] sm:$0xf] %vm1068, %v1404
    %1495 = vst.msk [vmem:[%s1487 + $0x1c] sm:$0xf] %vm1068, %v1406
    %1496 = vst.msk [vmem:[%s1487 + $0x20] sm:$0xf] %vm1068, %v1408
    %1497 = vst.msk [vmem:[%s1487 + $0x24] sm:$0xf] %vm1068, %v1410
    %1498 = vst.msk [vmem:[%s1487 + $0x28] sm:$0xf] %vm1068, %v1412
    %1499 = vst.msk [vmem:[%s1487 + $0x2c] sm:$0xf] %vm1068, %v1414
    %1500 = vst.msk [vmem:[%s1487 + $0x30] sm:$0xf] %vm1068, %v1416
    %1501 = vst.msk [vmem:[%s1487 + $0x34] sm:$0xf] %vm1068, %v1418
    %1502 = vst.msk [vmem:[%s1487 + $0x38] sm:$0xf] %vm1068, %v1420
    %1503 = vst.msk [vmem:[%s1487 + $0x3c] sm:$0xf] %vm1068, %v1422
    %1504 = vst.msk [vmem:[%s1487 + $0x40] sm:$0xf] %vm1068, %v1424
    %1505 = vst.msk [vmem:[%s1487 + $0x44] sm:$0xf] %vm1068, %v1426
    %1506 = vst.msk [vmem:[%s1487 + $0x48] sm:$0xf] %vm1068, %v1428
    %1507 = vst.msk [vmem:[%s1487 + $0x4c] sm:$0xf] %vm1068, %v1430
    %1508 = vst.msk [vmem:[%s1487 + $0x50] sm:$0xf] %vm1068, %v1432
    %1509 = vst.msk [vmem:[%s1487 + $0x54] sm:$0xf] %vm1068, %v1434
    %1510 = vst.msk [vmem:[%s1487 + $0x58] sm:$0xf] %vm1068, %v1436
    %1511 = vst.msk [vmem:[%s1487 + $0x5c] sm:$0xf] %vm1068, %v1438
    %1512 = vst.msk [vmem:[%s1487 + $0x60] sm:$0xf] %vm1068, %v1440
    %1513 = vst.msk [vmem:[%s1487 + $0x64] sm:$0xf] %vm1068, %v1442
    %1514 = vst.msk [vmem:[%s1487 + $0x68] sm:$0xf] %vm1068, %v1444
    %1515 = vst.msk [vmem:[%s1487 + $0x6c] sm:$0xf] %vm1068, %v1446
    %1516 = vst.msk [vmem:[%s1487 + $0x70] sm:$0xf] %vm1068, %v1448
    %1517 = vst.msk [vmem:[%s1487 + $0x74] sm:$0xf] %vm1068, %v1450
    %1518 = vst.msk [vmem:[%s1487 + $0x78] sm:$0xf] %vm1068, %v1452
    %1519 = vst.msk [vmem:[%s1487 + $0x7c] sm:$0xf] %vm1068, %v1454
    // Predicated region
    $region18: #{tpu_custom_call.1} parent=1 // pred_check
      _
    $region19: #{tpu_custom_call.1} parent=1 // pred_check_branch
      %1521 = sbr.rel (0) target = $region21
    $region20: #{tpu_custom_call.1} parent=1 // pred_region
      _
    $region21: #{tpu_custom_call.1} parent=1 // pred_fallthru
      _
    // Predicated region
    $region22: #{tpu_custom_call.1} parent=1 // pred_check
      _
    $region23: #{tpu_custom_call.1} parent=1 // pred_check_branch
      %1523 = sbr.rel (0) target = $region25
    $region24: #{tpu_custom_call.1} parent=1 // pred_region
      _
    $region25: #{tpu_custom_call.1} parent=1 // pred_fallthru
      _
    // Predicated region
    $region26: #{tpu_custom_call.1} parent=1 // pred_check
      _
    $region27: #{tpu_custom_call.1} parent=1 // pred_check_branch
      %1525 = sbr.rel (0) target = $region29
    $region28: #{tpu_custom_call.1} parent=1 // pred_region
      %s1527 = ssub.s32 128, 128
      %1528 = vsyncadd [#allocation3], %s1527
      %s1530 = sshll.u32 [#allocation2], 4
      %s1531 = int_to_ptr.vmem [resolvable:$true] %s1530
      %1533 = dma.vmem_to_hbm [thread:$0]  %s1531, 128, %s6, [#allocation3]
    $region29: #{tpu_custom_call.1} parent=1 // pred_fallthru
      _
    // Predicated region
    $region30: #{tpu_custom_call.1} parent=1 // pred_check
      _
    $region31: #{tpu_custom_call.1} parent=1 // pred_check_branch
      %1535 = sbr.rel (0) target = $region33
    $region32: #{tpu_custom_call.1} parent=1 // pred_region
      _
    $region33: #{tpu_custom_call.1} parent=1 // pred_fallthru
      _
    // Predicated region
    $region34: #{tpu_custom_call.1} parent=1 // pred_check
      _
    $region35: #{tpu_custom_call.1} parent=1 // pred_check_branch
      %1537 = sbr.rel (0) target = $region37
    $region36: #{tpu_custom_call.1} parent=1 // pred_region
      _
    $region37: #{tpu_custom_call.1} parent=1 // pred_fallthru
      _
    // Predicated region
    $region38: #{tpu_custom_call.1} parent=1 // pred_check
      _
    $region39: #{tpu_custom_call.1} parent=1 // pred_check_branch
      %1539 = sbr.rel (0) target = $region41
    $region40: #{tpu_custom_call.1} parent=1 // pred_region
      %1540 = dma.done [#allocation3], 128
    $region41: #{tpu_custom_call.1} parent=1 // pred_fallthru
      _
    %1541 = vsyncpa [#allocation3], 1

</llo_original>
